<compile_context>
chip_gen: v6e
topology: v6e:2x2x1
jax: 0.10.0
libtpu: 0.0.40
codegen_flags: <defaults>
</compile_context>

<pallas_src>
import functools

import jax
import jax.numpy as jnp
import numpy as np
from jax import lax
from jax.experimental import pallas as pl
from jax.experimental.pallas import tpu as pltpu


def _conv3x3_channel_major(inp_f32, w_ref, masks_ref, shifts, cdt):
    """3x3 'SAME' conv on a channel-major (Cin, H*W) f32 register array.

    w_ref    : (9, Cout, Cin) Ref, tap-major (tap = kh*3 + kw), compute dtype
    masks_ref: (9, 1, H*W) Ref, f32 {0,1} per-tap boundary masks
    shifts   : 9 static lane-roll amounts (one per tap)
    Returns (Cout, H*W) f32.
    """
    acc = None
    for t, shift in enumerate(shifts):
        # roll(x, s)[m] == x[(m - s) mod M]; s = (-tap_offset) mod M therefore
        # yields x[m + tap_offset], i.e. the 3x3 neighbour on the flattened
        # pixel axis.  Out-of-image wrap-arounds are zeroed by the tap mask.
        tap = inp_f32 if shift == 0 else pltpu.roll(inp_f32, shift=shift, axis=1)
        if t != 4:  # centre tap never crosses the image boundary
            tap = tap * masks_ref[t]
        contrib = jnp.dot(w_ref[t], tap.astype(cdt),
                          preferred_element_type=jnp.float32)
        acc = contrib if acc is None else acc + contrib
    return acc


def basic_block_kernel(x_ref, masks_ref, w1_ref, b1_ref, w2_ref, b2_ref,
                       out_ref, *, H, W):
    """One image per grid step; everything channel-major (lane axis = H*W).

    x_ref    : (1, Cin, H*W) f32   channel-major input (conv taps + residual)
    masks_ref: (9, 1, H*W)  f32    per-tap boundary masks
    w1_ref   : (9, C, Cin)         conv1 weights * bn1 scale, tap-major
    b1_ref   : (C, 1)       f32    folded bn1 bias
    w2_ref   : (9, C, C)           conv2 weights * bn2 scale, tap-major
    b2_ref   : (C, 1)       f32    folded bn2 bias
    out_ref  : (1, C, H*W)  f32    channel-major output (lane-dense stores)
    """
    M = H * W
    C = out_ref.shape[1]
    cdt = w1_ref.dtype
    x = x_ref[0]                                              # (Cin, M) f32

    # Static lane shifts for the 9 taps, row-major over (dy, dx) in {-1,0,1}.
    shifts = [(-(dy * W + dx)) % M for dy in (-1, 0, 1) for dx in (-1, 0, 1)]

    acc1 = _conv3x3_channel_major(x, w1_ref, masks_ref, shifts, cdt)
    h1 = jnp.maximum(acc1 + b1_ref[...], 0.0)                 # bn1 + relu (C, M) f32
    acc2 = _conv3x3_channel_major(h1, w2_ref, masks_ref, shifts, cdt)
    out = jnp.maximum(acc2 + b2_ref[...] + x, 0.0)            # bn2 + residual + relu
    out_ref[...] = out.reshape(1, C, M).astype(out_ref.dtype)


def _tap_masks(H, W):
    """Per-tap {0,1} masks on the flattened H*W pixel axis, shape (9, 1, H*W)."""
    hh = np.arange(H).reshape(H, 1)
    ww = np.arange(W).reshape(1, W)
    masks = np.empty((9, 1, H * W), np.float32)
    t = 0
    for dy in (-1, 0, 1):
        for dx in (-1, 0, 1):
            ok = ((hh + dy >= 0) & (hh + dy <= H - 1) &
                  (ww + dx >= 0) & (ww + dx <= W - 1))
            masks[t, 0, :] = ok.astype(np.float32).reshape(-1)
            t += 1
    return jnp.asarray(masks)


def basic_block_pallas(x_nchw, w1_oihw, bn1, w2_oihw, bn2, eps=1e-5,
                       compute_dtype=jnp.bfloat16):
    """Wrapper: NCHW in / NCHW out.  BN folding, tap-major weight reshapes and
    boundary-mask generation are plain-JAX/NumPy layout plumbing.  bf16 matmul
    operands are fine on every generation (v5e/v6e/v7x MXU are bf16-native);
    accumulation and all elementwise math stay f32.
    """
    g1, be1, m1, v1 = bn1
    g2, be2, m2, v2 = bn2
    N, Cin, H, W = x_nchw.shape
    C = w1_oihw.shape[0]
    M = H * W
    # No downsample branch => residual add requires matching channel counts.
    assert Cin == C, "BasicBlock with downsample=None requires in_channel == channel"

    # Channel-major flattened input (free reshape of NCHW): used for both the
    # conv1 taps (via rolls) and the residual add.
    x_cm = x_nchw.astype(jnp.float32).reshape(N, Cin, M)

    # Fold inference-mode BatchNorm: scale goes into the conv weights (exact
    # per-output-channel scale), bias stays as a (C, 1) add in the kernel.
    inv1 = 1.0 / jnp.sqrt(v1 + eps)
    inv2 = 1.0 / jnp.sqrt(v2 + eps)
    s1 = g1 * inv1
    s2 = g2 * inv2
    b1 = (be1 - m1 * s1).reshape(C, 1).astype(jnp.float32)
    b2 = (be2 - m2 * s2).reshape(C, 1).astype(jnp.float32)

    # OIHW -> (tap, Cout, Cin) with tap = kh*3 + kw (matches the kernel's
    # (dy, dx) row-major tap order), scale folded, then cast to compute dtype.
    w1_t = jnp.transpose(w1_oihw, (2, 3, 0, 1)).reshape(9, C, Cin)
    w1_t = (w1_t * s1.reshape(1, C, 1)).astype(compute_dtype)
    w2_t = jnp.transpose(w2_oihw, (2, 3, 0, 1)).reshape(9, C, C)
    w2_t = (w2_t * s2.reshape(1, C, 1)).astype(compute_dtype)

    masks = _tap_masks(H, W)

    kernel = functools.partial(basic_block_kernel, H=H, W=W)
    out_cm = pl.pallas_call(
        kernel,
        out_shape=jax.ShapeDtypeStruct((N, C, M), jnp.float32),
        grid_spec=pltpu.PrefetchScalarGridSpec(
            num_scalar_prefetch=0,
            grid=(N,),
            in_specs=[
                pl.BlockSpec((1, Cin, M), lambda n: (n, 0, 0)),
                pl.BlockSpec((9, 1, M), lambda n: (0, 0, 0)),
                pl.BlockSpec((9, C, Cin), lambda n: (0, 0, 0)),
                pl.BlockSpec((C, 1), lambda n: (0, 0)),
                pl.BlockSpec((9, C, C), lambda n: (0, 0, 0)),
                pl.BlockSpec((C, 1), lambda n: (0, 0)),
            ],
            out_specs=pl.BlockSpec((1, C, M), lambda n: (n, 0, 0)),
        ),
        compiler_params=pltpu.CompilerParams(
            dimension_semantics=("parallel",)),
    )(x_cm, masks, w1_t, b1, w2_t, b2)

    # (N, C, H*W) is already channel-major: reshape straight to NCHW.
    return out_cm.reshape(N, C, H, W)


def basic_block_ref(x_nchw, w1_oihw, bn1, w2_oihw, bn2, eps=1e-5):
    """Pure-JAX reference (inference-mode BN), NCHW in / NCHW out."""
    g1, be1, m1, v1 = bn1
    g2, be2, m2, v2 = bn2
    x = jnp.transpose(x_nchw, (0, 2, 3, 1)).astype(jnp.float32)
    w1 = jnp.transpose(w1_oihw, (2, 3, 1, 0))
    w2 = jnp.transpose(w2_oihw, (2, 3, 1, 0))
    dn = ("NHWC", "HWIO", "NHWC")
    y = lax.conv_general_dilated(x, w1, (1, 1), "SAME", dimension_numbers=dn)
    y = (y - m1) / jnp.sqrt(v1 + eps) * g1 + be1
    y = jnp.maximum(y, 0.0)
    y = lax.conv_general_dilated(y, w2, (1, 1), "SAME", dimension_numbers=dn)
    y = (y - m2) / jnp.sqrt(v2 + eps) * g2 + be2
    y = jnp.maximum(y + x, 0.0)
    return jnp.transpose(y, (0, 3, 1, 2))


if __name__ == "__main__":
    # BasicBlock(in_channel=4, channel=4, stride=1, downsample=None)
    N, C, H, W = 2, 4, 16, 16
    key = jax.random.PRNGKey(0)
    kx, kw1, kw2, kg1, kb1, kg2, kb2, km1, kv1, km2, kv2 = jax.random.split(key, 11)

    x = jax.random.normal(kx, (N, C, H, W), jnp.float32)

    # Conv weights in PyTorch OIHW layout (out, in, kh, kw), bias=False.
    w1 = jax.random.normal(kw1, (C, C, 3, 3), jnp.float32) * 0.1
    w2 = jax.random.normal(kw2, (C, C, 3, 3), jnp.float32) * 0.1

    # BatchNorm params / running stats (deterministic, non-trivial).
    bn1 = (1.0 + 0.1 * jax.random.normal(kg1, (C,), jnp.float32),   # gamma
           0.1 * jax.random.normal(kb1, (C,), jnp.float32),         # beta
           0.1 * jax.random.normal(km1, (C,), jnp.float32),         # running_mean
           1.0 + 0.1 * jax.nn.softplus(jax.random.normal(kv1, (C,), jnp.float32)))  # running_var
    bn2 = (1.0 + 0.1 * jax.random.normal(kg2, (C,), jnp.float32),
           0.1 * jax.random.normal(kb2, (C,), jnp.float32),
           0.1 * jax.random.normal(km2, (C,), jnp.float32),
           1.0 + 0.1 * jax.nn.softplus(jax.random.normal(kv2, (C,), jnp.float32)))

    ref = jax.block_until_ready(basic_block_ref(x, w1, bn1, w2, bn2))

    # f32 matmul operands: tight check of the kernel semantics.
    out_f32 = jax.block_until_ready(
        basic_block_pallas(x, w1, bn1, w2, bn2, compute_dtype=jnp.float32))
    np.testing.assert_allclose(np.asarray(out_f32), np.asarray(ref),
                               rtol=1e-4, atol=1e-4)

    # bf16 matmul operands (default / recommended on all generations): looser
    # tolerance reflects expected mixed-precision rounding, not a bug.
    out_bf16 = jax.block_until_ready(
        basic_block_pallas(x, w1, bn1, w2, bn2, compute_dtype=jnp.bfloat16))
    np.testing.assert_allclose(np.asarray(out_bf16), np.asarray(ref),
                               rtol=5e-2, atol=5e-2)

    print("KERNEL_OK")
</pallas_src>

<mosaic_0001>
module attributes {stable_mosaic.version = 11 : i64} {
  func.func @basic_block_kernel(%arg0: i32, %arg1: memref<1x4x256xf32, #tpu.memory_space<vmem>>, %arg2: memref<9x1x256xf32, #tpu.memory_space<vmem>>, %arg3: memref<9x4x4xf32, #tpu.memory_space<vmem>>, %arg4: memref<4x1xf32, #tpu.memory_space<vmem>>, %arg5: memref<9x4x4xf32, #tpu.memory_space<vmem>>, %arg6: memref<4x1xf32, #tpu.memory_space<vmem>>, %arg7: memref<1x4x256xf32, #tpu.memory_space<vmem>>) attributes {dimension_semantics = [#tpu.dimension_semantics<parallel>], iteration_bounds = array<i64: 2>, scalar_prefetch = 0 : i64, scratch_operands = 0 : i64, tpu.core_type = #tpu.core_type<tc>, window_params = [{transform_indices = @transform_0, window_bounds = array<i64: 1, 4, 256>}, {pipeline_mode = #tpu.pipeline_mode<synchronous>, transform_indices = @transform_1, window_bounds = array<i64: 9, 1, 256>}, {pipeline_mode = #tpu.pipeline_mode<synchronous>, transform_indices = @transform_2, window_bounds = array<i64: 9, 4, 4>}, {pipeline_mode = #tpu.pipeline_mode<synchronous>, transform_indices = @transform_3, window_bounds = array<i64: 4, 1>}, {pipeline_mode = #tpu.pipeline_mode<synchronous>, transform_indices = @transform_4, window_bounds = array<i64: 9, 4, 4>}, {pipeline_mode = #tpu.pipeline_mode<synchronous>, transform_indices = @transform_5, window_bounds = array<i64: 4, 1>}, {transform_indices = @transform_6, window_bounds = array<i64: 1, 4, 256>}]} {
    %c0 = arith.constant 0 : index
    %c0_0 = arith.constant 0 : index
    %c0_1 = arith.constant 0 : index
    %0 = vector.load %arg1[%c0, %c0_0, %c0_1] : memref<1x4x256xf32, #tpu.memory_space<vmem>>, vector<1x4x256xf32>
    %1 = vector.shape_cast %0 : vector<1x4x256xf32> to vector<4x256xf32>
    %c17_i32 = arith.constant 17 : i32
    %2 = tpu.dynamic_rotate %1 by %c17_i32 dim 1 : vector<4x256xf32>, i32 -> vector<4x256xf32>
    %c0_2 = arith.constant 0 : index
    %c0_3 = arith.constant 0 : index
    %c0_4 = arith.constant 0 : index
    %3 = vector.load %arg2[%c0_2, %c0_3, %c0_4] : memref<9x1x256xf32, #tpu.memory_space<vmem>>, vector<1x1x256xf32>
    %4 = vector.shape_cast %3 : vector<1x1x256xf32> to vector<1x256xf32>
    %5 = vector.broadcast %4 : vector<1x256xf32> to vector<4x256xf32>
    %6 = arith.mulf %2, %5 : vector<4x256xf32>
    %c0_5 = arith.constant 0 : index
    %c0_6 = arith.constant 0 : index
    %c0_7 = arith.constant 0 : index
    %7 = vector.load %arg3[%c0_5, %c0_6, %c0_7] : memref<9x4x4xf32, #tpu.memory_space<vmem>>, vector<1x4x4xf32>
    %8 = vector.shape_cast %7 : vector<1x4x4xf32> to vector<4x4xf32>
    %cst = arith.constant dense<0.000000e+00> : vector<4x256xf32>
    %9 = tpu.matmul %8, %6, %cst {dimension_numbers = #tpu.dot_dimension_numbers<[1], [0], [0], [1], [0, 0, 1, 1], [], []>} : vector<4x4xf32>, vector<4x256xf32>, vector<4x256xf32> -> vector<4x256xf32>
    %c16_i32 = arith.constant 16 : i32
    %10 = tpu.dynamic_rotate %1 by %c16_i32 dim 1 : vector<4x256xf32>, i32 -> vector<4x256xf32>
    %c1 = arith.constant 1 : index
    %c0_8 = arith.constant 0 : index
    %c0_9 = arith.constant 0 : index
    %11 = vector.load %arg2[%c1, %c0_8, %c0_9] : memref<9x1x256xf32, #tpu.memory_space<vmem>>, vector<1x1x256xf32>
    %12 = vector.shape_cast %11 : vector<1x1x256xf32> to vector<1x256xf32>
    %13 = vector.broadcast %12 : vector<1x256xf32> to vector<4x256xf32>
    %14 = arith.mulf %10, %13 : vector<4x256xf32>
    %c1_10 = arith.constant 1 : index
    %c0_11 = arith.constant 0 : index
    %c0_12 = arith.constant 0 : index
    %15 = vector.load %arg3[%c1_10, %c0_11, %c0_12] : memref<9x4x4xf32, #tpu.memory_space<vmem>>, vector<1x4x4xf32>
    %16 = vector.shape_cast %15 : vector<1x4x4xf32> to vector<4x4xf32>
    %cst_13 = arith.constant dense<0.000000e+00> : vector<4x256xf32>
    %17 = tpu.matmul %16, %14, %cst_13 {dimension_numbers = #tpu.dot_dimension_numbers<[1], [0], [0], [1], [0, 0, 1, 1], [], []>} : vector<4x4xf32>, vector<4x256xf32>, vector<4x256xf32> -> vector<4x256xf32>
    %18 = arith.addf %9, %17 : vector<4x256xf32>
    %c15_i32 = arith.constant 15 : i32
    %19 = tpu.dynamic_rotate %1 by %c15_i32 dim 1 : vector<4x256xf32>, i32 -> vector<4x256xf32>
    %c2 = arith.constant 2 : index
    %c0_14 = arith.constant 0 : index
    %c0_15 = arith.constant 0 : index
    %20 = vector.load %arg2[%c2, %c0_14, %c0_15] : memref<9x1x256xf32, #tpu.memory_space<vmem>>, vector<1x1x256xf32>
    %21 = vector.shape_cast %20 : vector<1x1x256xf32> to vector<1x256xf32>
    %22 = vector.broadcast %21 : vector<1x256xf32> to vector<4x256xf32>
    %23 = arith.mulf %19, %22 : vector<4x256xf32>
    %c2_16 = arith.constant 2 : index
    %c0_17 = arith.constant 0 : index
    %c0_18 = arith.constant 0 : index
    %24 = vector.load %arg3[%c2_16, %c0_17, %c0_18] : memref<9x4x4xf32, #tpu.memory_space<vmem>>, vector<1x4x4xf32>
    %25 = vector.shape_cast %24 : vector<1x4x4xf32> to vector<4x4xf32>
    %cst_19 = arith.constant dense<0.000000e+00> : vector<4x256xf32>
    %26 = tpu.matmul %25, %23, %cst_19 {dimension_numbers = #tpu.dot_dimension_numbers<[1], [0], [0], [1], [0, 0, 1, 1], [], []>} : vector<4x4xf32>, vector<4x256xf32>, vector<4x256xf32> -> vector<4x256xf32>
    %27 = arith.addf %18, %26 : vector<4x256xf32>
    %c1_i32 = arith.constant 1 : i32
    %28 = tpu.dynamic_rotate %1 by %c1_i32 dim 1 : vector<4x256xf32>, i32 -> vector<4x256xf32>
    %c3 = arith.constant 3 : index
    %c0_20 = arith.constant 0 : index
    %c0_21 = arith.constant 0 : index
    %29 = vector.load %arg2[%c3, %c0_20, %c0_21] : memref<9x1x256xf32, #tpu.memory_space<vmem>>, vector<1x1x256xf32>
    %30 = vector.shape_cast %29 : vector<1x1x256xf32> to vector<1x256xf32>
    %31 = vector.broadcast %30 : vector<1x256xf32> to vector<4x256xf32>
    %32 = arith.mulf %28, %31 : vector<4x256xf32>
    %c3_22 = arith.constant 3 : index
    %c0_23 = arith.constant 0 : index
    %c0_24 = arith.constant 0 : index
    %33 = vector.load %arg3[%c3_22, %c0_23, %c0_24] : memref<9x4x4xf32, #tpu.memory_space<vmem>>, vector<1x4x4xf32>
    %34 = vector.shape_cast %33 : vector<1x4x4xf32> to vector<4x4xf32>
    %cst_25 = arith.constant dense<0.000000e+00> : vector<4x256xf32>
    %35 = tpu.matmul %34, %32, %cst_25 {dimension_numbers = #tpu.dot_dimension_numbers<[1], [0], [0], [1], [0, 0, 1, 1], [], []>} : vector<4x4xf32>, vector<4x256xf32>, vector<4x256xf32> -> vector<4x256xf32>
    %36 = arith.addf %27, %35 : vector<4x256xf32>
    %c4 = arith.constant 4 : index
    %c0_26 = arith.constant 0 : index
    %c0_27 = arith.constant 0 : index
    %37 = vector.load %arg3[%c4, %c0_26, %c0_27] : memref<9x4x4xf32, #tpu.memory_space<vmem>>, vector<1x4x4xf32>
    %38 = vector.shape_cast %37 : vector<1x4x4xf32> to vector<4x4xf32>
    %cst_28 = arith.constant dense<0.000000e+00> : vector<4x256xf32>
    %39 = tpu.matmul %38, %1, %cst_28 {dimension_numbers = #tpu.dot_dimension_numbers<[1], [0], [0], [1], [0, 0, 1, 1], [], []>} : vector<4x4xf32>, vector<4x256xf32>, vector<4x256xf32> -> vector<4x256xf32>
    %40 = arith.addf %36, %39 : vector<4x256xf32>
    %c255_i32 = arith.constant 255 : i32
    %41 = tpu.dynamic_rotate %1 by %c255_i32 dim 1 : vector<4x256xf32>, i32 -> vector<4x256xf32>
    %c5 = arith.constant 5 : index
    %c0_29 = arith.constant 0 : index
    %c0_30 = arith.constant 0 : index
    %42 = vector.load %arg2[%c5, %c0_29, %c0_30] : memref<9x1x256xf32, #tpu.memory_space<vmem>>, vector<1x1x256xf32>
    %43 = vector.shape_cast %42 : vector<1x1x256xf32> to vector<1x256xf32>
    %44 = vector.broadcast %43 : vector<1x256xf32> to vector<4x256xf32>
    %45 = arith.mulf %41, %44 : vector<4x256xf32>
    %c5_31 = arith.constant 5 : index
    %c0_32 = arith.constant 0 : index
    %c0_33 = arith.constant 0 : index
    %46 = vector.load %arg3[%c5_31, %c0_32, %c0_33] : memref<9x4x4xf32, #tpu.memory_space<vmem>>, vector<1x4x4xf32>
    %47 = vector.shape_cast %46 : vector<1x4x4xf32> to vector<4x4xf32>
    %cst_34 = arith.constant dense<0.000000e+00> : vector<4x256xf32>
    %48 = tpu.matmul %47, %45, %cst_34 {dimension_numbers = #tpu.dot_dimension_numbers<[1], [0], [0], [1], [0, 0, 1, 1], [], []>} : vector<4x4xf32>, vector<4x256xf32>, vector<4x256xf32> -> vector<4x256xf32>
    %49 = arith.addf %40, %48 : vector<4x256xf32>
    %c241_i32 = arith.constant 241 : i32
    %50 = tpu.dynamic_rotate %1 by %c241_i32 dim 1 : vector<4x256xf32>, i32 -> vector<4x256xf32>
    %c6 = arith.constant 6 : index
    %c0_35 = arith.constant 0 : index
    %c0_36 = arith.constant 0 : index
    %51 = vector.load %arg2[%c6, %c0_35, %c0_36] : memref<9x1x256xf32, #tpu.memory_space<vmem>>, vector<1x1x256xf32>
    %52 = vector.shape_cast %51 : vector<1x1x256xf32> to vector<1x256xf32>
    %53 = vector.broadcast %52 : vector<1x256xf32> to vector<4x256xf32>
    %54 = arith.mulf %50, %53 : vector<4x256xf32>
    %c6_37 = arith.constant 6 : index
    %c0_38 = arith.constant 0 : index
    %c0_39 = arith.constant 0 : index
    %55 = vector.load %arg3[%c6_37, %c0_38, %c0_39] : memref<9x4x4xf32, #tpu.memory_space<vmem>>, vector<1x4x4xf32>
    %56 = vector.shape_cast %55 : vector<1x4x4xf32> to vector<4x4xf32>
    %cst_40 = arith.constant dense<0.000000e+00> : vector<4x256xf32>
    %57 = tpu.matmul %56, %54, %cst_40 {dimension_numbers = #tpu.dot_dimension_numbers<[1], [0], [0], [1], [0, 0, 1, 1], [], []>} : vector<4x4xf32>, vector<4x256xf32>, vector<4x256xf32> -> vector<4x256xf32>
    %58 = arith.addf %49, %57 : vector<4x256xf32>
    %c240_i32 = arith.constant 240 : i32
    %59 = tpu.dynamic_rotate %1 by %c240_i32 dim 1 : vector<4x256xf32>, i32 -> vector<4x256xf32>
    %c7 = arith.constant 7 : index
    %c0_41 = arith.constant 0 : index
    %c0_42 = arith.constant 0 : index
    %60 = vector.load %arg2[%c7, %c0_41, %c0_42] : memref<9x1x256xf32, #tpu.memory_space<vmem>>, vector<1x1x256xf32>
    %61 = vector.shape_cast %60 : vector<1x1x256xf32> to vector<1x256xf32>
    %62 = vector.broadcast %61 : vector<1x256xf32> to vector<4x256xf32>
    %63 = arith.mulf %59, %62 : vector<4x256xf32>
    %c7_43 = arith.constant 7 : index
    %c0_44 = arith.constant 0 : index
    %c0_45 = arith.constant 0 : index
    %64 = vector.load %arg3[%c7_43, %c0_44, %c0_45] : memref<9x4x4xf32, #tpu.memory_space<vmem>>, vector<1x4x4xf32>
    %65 = vector.shape_cast %64 : vector<1x4x4xf32> to vector<4x4xf32>
    %cst_46 = arith.constant dense<0.000000e+00> : vector<4x256xf32>
    %66 = tpu.matmul %65, %63, %cst_46 {dimension_numbers = #tpu.dot_dimension_numbers<[1], [0], [0], [1], [0, 0, 1, 1], [], []>} : vector<4x4xf32>, vector<4x256xf32>, vector<4x256xf32> -> vector<4x256xf32>
    %67 = arith.addf %58, %66 : vector<4x256xf32>
    %c239_i32 = arith.constant 239 : i32
    %68 = tpu.dynamic_rotate %1 by %c239_i32 dim 1 : vector<4x256xf32>, i32 -> vector<4x256xf32>
    %c8 = arith.constant 8 : index
    %c0_47 = arith.constant 0 : index
    %c0_48 = arith.constant 0 : index
    %69 = vector.load %arg2[%c8, %c0_47, %c0_48] : memref<9x1x256xf32, #tpu.memory_space<vmem>>, vector<1x1x256xf32>
    %70 = vector.shape_cast %69 : vector<1x1x256xf32> to vector<1x256xf32>
    %71 = vector.broadcast %70 : vector<1x256xf32> to vector<4x256xf32>
    %72 = arith.mulf %68, %71 : vector<4x256xf32>
    %c8_49 = arith.constant 8 : index
    %c0_50 = arith.constant 0 : index
    %c0_51 = arith.constant 0 : index
    %73 = vector.load %arg3[%c8_49, %c0_50, %c0_51] : memref<9x4x4xf32, #tpu.memory_space<vmem>>, vector<1x4x4xf32>
    %74 = vector.shape_cast %73 : vector<1x4x4xf32> to vector<4x4xf32>
    %cst_52 = arith.constant dense<0.000000e+00> : vector<4x256xf32>
    %75 = tpu.matmul %74, %72, %cst_52 {dimension_numbers = #tpu.dot_dimension_numbers<[1], [0], [0], [1], [0, 0, 1, 1], [], []>} : vector<4x4xf32>, vector<4x256xf32>, vector<4x256xf32> -> vector<4x256xf32>
    %76 = arith.addf %67, %75 : vector<4x256xf32>
    %c0_53 = arith.constant 0 : index
    %c0_54 = arith.constant 0 : index
    %77 = vector.load %arg4[%c0_53, %c0_54] : memref<4x1xf32, #tpu.memory_space<vmem>>, vector<4x1xf32>
    %78 = vector.broadcast %77 : vector<4x1xf32> to vector<4x256xf32>
    %79 = arith.addf %76, %78 : vector<4x256xf32>
    %cst_55 = arith.constant 0.000000e+00 : f32
    %80 = vector.broadcast %cst_55 : f32 to vector<4x256xf32>
    %81 = arith.maximumf %79, %80 : vector<4x256xf32>
    %c17_i32_56 = arith.constant 17 : i32
    %82 = tpu.dynamic_rotate %81 by %c17_i32_56 dim 1 : vector<4x256xf32>, i32 -> vector<4x256xf32>
    %c0_57 = arith.constant 0 : index
    %c0_58 = arith.constant 0 : index
    %c0_59 = arith.constant 0 : index
    %83 = vector.load %arg2[%c0_57, %c0_58, %c0_59] : memref<9x1x256xf32, #tpu.memory_space<vmem>>, vector<1x1x256xf32>
    %84 = vector.shape_cast %83 : vector<1x1x256xf32> to vector<1x256xf32>
    %85 = vector.broadcast %84 : vector<1x256xf32> to vector<4x256xf32>
    %86 = arith.mulf %82, %85 : vector<4x256xf32>
    %c0_60 = arith.constant 0 : index
    %c0_61 = arith.constant 0 : index
    %c0_62 = arith.constant 0 : index
    %87 = vector.load %arg5[%c0_60, %c0_61, %c0_62] : memref<9x4x4xf32, #tpu.memory_space<vmem>>, vector<1x4x4xf32>
    %88 = vector.shape_cast %87 : vector<1x4x4xf32> to vector<4x4xf32>
    %cst_63 = arith.constant dense<0.000000e+00> : vector<4x256xf32>
    %89 = tpu.matmul %88, %86, %cst_63 {dimension_numbers = #tpu.dot_dimension_numbers<[1], [0], [0], [1], [0, 0, 1, 1], [], []>} : vector<4x4xf32>, vector<4x256xf32>, vector<4x256xf32> -> vector<4x256xf32>
    %c16_i32_64 = arith.constant 16 : i32
    %90 = tpu.dynamic_rotate %81 by %c16_i32_64 dim 1 : vector<4x256xf32>, i32 -> vector<4x256xf32>
    %c1_65 = arith.constant 1 : index
    %c0_66 = arith.constant 0 : index
    %c0_67 = arith.constant 0 : index
    %91 = vector.load %arg2[%c1_65, %c0_66, %c0_67] : memref<9x1x256xf32, #tpu.memory_space<vmem>>, vector<1x1x256xf32>
    %92 = vector.shape_cast %91 : vector<1x1x256xf32> to vector<1x256xf32>
    %93 = vector.broadcast %92 : vector<1x256xf32> to vector<4x256xf32>
    %94 = arith.mulf %90, %93 : vector<4x256xf32>
    %c1_68 = arith.constant 1 : index
    %c0_69 = arith.constant 0 : index
    %c0_70 = arith.constant 0 : index
    %95 = vector.load %arg5[%c1_68, %c0_69, %c0_70] : memref<9x4x4xf32, #tpu.memory_space<vmem>>, vector<1x4x4xf32>
    %96 = vector.shape_cast %95 : vector<1x4x4xf32> to vector<4x4xf32>
    %cst_71 = arith.constant dense<0.000000e+00> : vector<4x256xf32>
    %97 = tpu.matmul %96, %94, %cst_71 {dimension_numbers = #tpu.dot_dimension_numbers<[1], [0], [0], [1], [0, 0, 1, 1], [], []>} : vector<4x4xf32>, vector<4x256xf32>, vector<4x256xf32> -> vector<4x256xf32>
    %98 = arith.addf %89, %97 : vector<4x256xf32>
    %c15_i32_72 = arith.constant 15 : i32
    %99 = tpu.dynamic_rotate %81 by %c15_i32_72 dim 1 : vector<4x256xf32>, i32 -> vector<4x256xf32>
    %c2_73 = arith.constant 2 : index
    %c0_74 = arith.constant 0 : index
    %c0_75 = arith.constant 0 : index
    %100 = vector.load %arg2[%c2_73, %c0_74, %c0_75] : memref<9x1x256xf32, #tpu.memory_space<vmem>>, vector<1x1x256xf32>
    %101 = vector.shape_cast %100 : vector<1x1x256xf32> to vector<1x256xf32>
    %102 = vector.broadcast %101 : vector<1x256xf32> to vector<4x256xf32>
    %103 = arith.mulf %99, %102 : vector<4x256xf32>
    %c2_76 = arith.constant 2 : index
    %c0_77 = arith.constant 0 : index
    %c0_78 = arith.constant 0 : index
    %104 = vector.load %arg5[%c2_76, %c0_77, %c0_78] : memref<9x4x4xf32, #tpu.memory_space<vmem>>, vector<1x4x4xf32>
    %105 = vector.shape_cast %104 : vector<1x4x4xf32> to vector<4x4xf32>
    %cst_79 = arith.constant dense<0.000000e+00> : vector<4x256xf32>
    %106 = tpu.matmul %105, %103, %cst_79 {dimension_numbers = #tpu.dot_dimension_numbers<[1], [0], [0], [1], [0, 0, 1, 1], [], []>} : vector<4x4xf32>, vector<4x256xf32>, vector<4x256xf32> -> vector<4x256xf32>
    %107 = arith.addf %98, %106 : vector<4x256xf32>
    %c1_i32_80 = arith.constant 1 : i32
    %108 = tpu.dynamic_rotate %81 by %c1_i32_80 dim 1 : vector<4x256xf32>, i32 -> vector<4x256xf32>
    %c3_81 = arith.constant 3 : index
    %c0_82 = arith.constant 0 : index
    %c0_83 = arith.constant 0 : index
    %109 = vector.load %arg2[%c3_81, %c0_82, %c0_83] : memref<9x1x256xf32, #tpu.memory_space<vmem>>, vector<1x1x256xf32>
    %110 = vector.shape_cast %109 : vector<1x1x256xf32> to vector<1x256xf32>
    %111 = vector.broadcast %110 : vector<1x256xf32> to vector<4x256xf32>
    %112 = arith.mulf %108, %111 : vector<4x256xf32>
    %c3_84 = arith.constant 3 : index
    %c0_85 = arith.constant 0 : index
    %c0_86 = arith.constant 0 : index
    %113 = vector.load %arg5[%c3_84, %c0_85, %c0_86] : memref<9x4x4xf32, #tpu.memory_space<vmem>>, vector<1x4x4xf32>
    %114 = vector.shape_cast %113 : vector<1x4x4xf32> to vector<4x4xf32>
    %cst_87 = arith.constant dense<0.000000e+00> : vector<4x256xf32>
    %115 = tpu.matmul %114, %112, %cst_87 {dimension_numbers = #tpu.dot_dimension_numbers<[1], [0], [0], [1], [0, 0, 1, 1], [], []>} : vector<4x4xf32>, vector<4x256xf32>, vector<4x256xf32> -> vector<4x256xf32>
    %116 = arith.addf %107, %115 : vector<4x256xf32>
    %c4_88 = arith.constant 4 : index
    %c0_89 = arith.constant 0 : index
    %c0_90 = arith.constant 0 : index
    %117 = vector.load %arg5[%c4_88, %c0_89, %c0_90] : memref<9x4x4xf32, #tpu.memory_space<vmem>>, vector<1x4x4xf32>
    %118 = vector.shape_cast %117 : vector<1x4x4xf32> to vector<4x4xf32>
    %cst_91 = arith.constant dense<0.000000e+00> : vector<4x256xf32>
    %119 = tpu.matmul %118, %81, %cst_91 {dimension_numbers = #tpu.dot_dimension_numbers<[1], [0], [0], [1], [0, 0, 1, 1], [], []>} : vector<4x4xf32>, vector<4x256xf32>, vector<4x256xf32> -> vector<4x256xf32>
    %120 = arith.addf %116, %119 : vector<4x256xf32>
    %c255_i32_92 = arith.constant 255 : i32
    %121 = tpu.dynamic_rotate %81 by %c255_i32_92 dim 1 : vector<4x256xf32>, i32 -> vector<4x256xf32>
    %c5_93 = arith.constant 5 : index
    %c0_94 = arith.constant 0 : index
    %c0_95 = arith.constant 0 : index
    %122 = vector.load %arg2[%c5_93, %c0_94, %c0_95] : memref<9x1x256xf32, #tpu.memory_space<vmem>>, vector<1x1x256xf32>
    %123 = vector.shape_cast %122 : vector<1x1x256xf32> to vector<1x256xf32>
    %124 = vector.broadcast %123 : vector<1x256xf32> to vector<4x256xf32>
    %125 = arith.mulf %121, %124 : vector<4x256xf32>
    %c5_96 = arith.constant 5 : index
    %c0_97 = arith.constant 0 : index
    %c0_98 = arith.constant 0 : index
    %126 = vector.load %arg5[%c5_96, %c0_97, %c0_98] : memref<9x4x4xf32, #tpu.memory_space<vmem>>, vector<1x4x4xf32>
    %127 = vector.shape_cast %126 : vector<1x4x4xf32> to vector<4x4xf32>
    %cst_99 = arith.constant dense<0.000000e+00> : vector<4x256xf32>
    %128 = tpu.matmul %127, %125, %cst_99 {dimension_numbers = #tpu.dot_dimension_numbers<[1], [0], [0], [1], [0, 0, 1, 1], [], []>} : vector<4x4xf32>, vector<4x256xf32>, vector<4x256xf32> -> vector<4x256xf32>
    %129 = arith.addf %120, %128 : vector<4x256xf32>
    %c241_i32_100 = arith.constant 241 : i32
    %130 = tpu.dynamic_rotate %81 by %c241_i32_100 dim 1 : vector<4x256xf32>, i32 -> vector<4x256xf32>
    %c6_101 = arith.constant 6 : index
    %c0_102 = arith.constant 0 : index
    %c0_103 = arith.constant 0 : index
    %131 = vector.load %arg2[%c6_101, %c0_102, %c0_103] : memref<9x1x256xf32, #tpu.memory_space<vmem>>, vector<1x1x256xf32>
    %132 = vector.shape_cast %131 : vector<1x1x256xf32> to vector<1x256xf32>
    %133 = vector.broadcast %132 : vector<1x256xf32> to vector<4x256xf32>
    %134 = arith.mulf %130, %133 : vector<4x256xf32>
    %c6_104 = arith.constant 6 : index
    %c0_105 = arith.constant 0 : index
    %c0_106 = arith.constant 0 : index
    %135 = vector.load %arg5[%c6_104, %c0_105, %c0_106] : memref<9x4x4xf32, #tpu.memory_space<vmem>>, vector<1x4x4xf32>
    %136 = vector.shape_cast %135 : vector<1x4x4xf32> to vector<4x4xf32>
    %cst_107 = arith.constant dense<0.000000e+00> : vector<4x256xf32>
    %137 = tpu.matmul %136, %134, %cst_107 {dimension_numbers = #tpu.dot_dimension_numbers<[1], [0], [0], [1], [0, 0, 1, 1], [], []>} : vector<4x4xf32>, vector<4x256xf32>, vector<4x256xf32> -> vector<4x256xf32>
    %138 = arith.addf %129, %137 : vector<4x256xf32>
    %c240_i32_108 = arith.constant 240 : i32
    %139 = tpu.dynamic_rotate %81 by %c240_i32_108 dim 1 : vector<4x256xf32>, i32 -> vector<4x256xf32>
    %c7_109 = arith.constant 7 : index
    %c0_110 = arith.constant 0 : index
    %c0_111 = arith.constant 0 : index
    %140 = vector.load %arg2[%c7_109, %c0_110, %c0_111] : memref<9x1x256xf32, #tpu.memory_space<vmem>>, vector<1x1x256xf32>
    %141 = vector.shape_cast %140 : vector<1x1x256xf32> to vector<1x256xf32>
    %142 = vector.broadcast %141 : vector<1x256xf32> to vector<4x256xf32>
    %143 = arith.mulf %139, %142 : vector<4x256xf32>
    %c7_112 = arith.constant 7 : index
    %c0_113 = arith.constant 0 : index
    %c0_114 = arith.constant 0 : index
    %144 = vector.load %arg5[%c7_112, %c0_113, %c0_114] : memref<9x4x4xf32, #tpu.memory_space<vmem>>, vector<1x4x4xf32>
    %145 = vector.shape_cast %144 : vector<1x4x4xf32> to vector<4x4xf32>
    %cst_115 = arith.constant dense<0.000000e+00> : vector<4x256xf32>
    %146 = tpu.matmul %145, %143, %cst_115 {dimension_numbers = #tpu.dot_dimension_numbers<[1], [0], [0], [1], [0, 0, 1, 1], [], []>} : vector<4x4xf32>, vector<4x256xf32>, vector<4x256xf32> -> vector<4x256xf32>
    %147 = arith.addf %138, %146 : vector<4x256xf32>
    %c239_i32_116 = arith.constant 239 : i32
    %148 = tpu.dynamic_rotate %81 by %c239_i32_116 dim 1 : vector<4x256xf32>, i32 -> vector<4x256xf32>
    %c8_117 = arith.constant 8 : index
    %c0_118 = arith.constant 0 : index
    %c0_119 = arith.constant 0 : index
    %149 = vector.load %arg2[%c8_117, %c0_118, %c0_119] : memref<9x1x256xf32, #tpu.memory_space<vmem>>, vector<1x1x256xf32>
    %150 = vector.shape_cast %149 : vector<1x1x256xf32> to vector<1x256xf32>
    %151 = vector.broadcast %150 : vector<1x256xf32> to vector<4x256xf32>
    %152 = arith.mulf %148, %151 : vector<4x256xf32>
    %c8_120 = arith.constant 8 : index
    %c0_121 = arith.constant 0 : index
    %c0_122 = arith.constant 0 : index
    %153 = vector.load %arg5[%c8_120, %c0_121, %c0_122] : memref<9x4x4xf32, #tpu.memory_space<vmem>>, vector<1x4x4xf32>
    %154 = vector.shape_cast %153 : vector<1x4x4xf32> to vector<4x4xf32>
    %cst_123 = arith.constant dense<0.000000e+00> : vector<4x256xf32>
    %155 = tpu.matmul %154, %152, %cst_123 {dimension_numbers = #tpu.dot_dimension_numbers<[1], [0], [0], [1], [0, 0, 1, 1], [], []>} : vector<4x4xf32>, vector<4x256xf32>, vector<4x256xf32> -> vector<4x256xf32>
    %156 = arith.addf %147, %155 : vector<4x256xf32>
    %c0_124 = arith.constant 0 : index
    %c0_125 = arith.constant 0 : index
    %157 = vector.load %arg6[%c0_124, %c0_125] : memref<4x1xf32, #tpu.memory_space<vmem>>, vector<4x1xf32>
    %158 = vector.broadcast %157 : vector<4x1xf32> to vector<4x256xf32>
    %159 = arith.addf %156, %158 : vector<4x256xf32>
    %160 = arith.addf %159, %1 : vector<4x256xf32>
    %cst_126 = arith.constant 0.000000e+00 : f32
    %161 = vector.broadcast %cst_126 : f32 to vector<4x256xf32>
    %162 = arith.maximumf %160, %161 : vector<4x256xf32>
    %163 = vector.shape_cast %162 : vector<4x256xf32> to vector<1x4x256xf32>
    %c0_127 = arith.constant 0 : index
    %c0_128 = arith.constant 0 : index
    %c0_129 = arith.constant 0 : index
    %164 = vector.load %arg7[%c0_127, %c0_128, %c0_129] : memref<1x4x256xf32, #tpu.memory_space<vmem>>, vector<1x4x256xf32>
    tpu.vector_store %arg7[%c0_127, %c0_128, %c0_129], %163 {strides = array<i32>} : memref<1x4x256xf32, #tpu.memory_space<vmem>>, vector<1x4x256xf32>,
    return
  }
  func.func @transform_0(%arg0: i32) -> (i32, i32, i32) {
    %c0_i32 = arith.constant 0 : i32
    %c0_i32_0 = arith.constant 0 : i32
    %c0_i32_1 = arith.constant 0 : i32
    return %arg0, %c0_i32, %c0_i32_0 : i32, i32, i32
  }
  func.func @transform_1(%arg0: i32) -> (i32, i32, i32) {
    %c0_i32 = arith.constant 0 : i32
    %c0_i32_0 = arith.constant 0 : i32
    %c0_i32_1 = arith.constant 0 : i32
    %c0_i32_2 = arith.constant 0 : i32
    return %c0_i32, %c0_i32_0, %c0_i32_1 : i32, i32, i32
  }
  func.func @transform_2(%arg0: i32) -> (i32, i32, i32) {
    %c0_i32 = arith.constant 0 : i32
    %c0_i32_0 = arith.constant 0 : i32
    %c0_i32_1 = arith.constant 0 : i32
    %c0_i32_2 = arith.constant 0 : i32
    return %c0_i32, %c0_i32_0, %c0_i32_1 : i32, i32, i32
  }
  func.func @transform_3(%arg0: i32) -> (i32, i32) {
    %c0_i32 = arith.constant 0 : i32
    %c0_i32_0 = arith.constant 0 : i32
    %c0_i32_1 = arith.constant 0 : i32
    return %c0_i32, %c0_i32_0 : i32, i32
  }
  func.func @transform_4(%arg0: i32) -> (i32, i32, i32) {
    %c0_i32 = arith.constant 0 : i32
    %c0_i32_0 = arith.constant 0 : i32
    %c0_i32_1 = arith.constant 0 : i32
    %c0_i32_2 = arith.constant 0 : i32
    return %c0_i32, %c0_i32_0, %c0_i32_1 : i32, i32, i32
  }
  func.func @transform_5(%arg0: i32) -> (i32, i32) {
    %c0_i32 = arith.constant 0 : i32
    %c0_i32_0 = arith.constant 0 : i32
    %c0_i32_1 = arith.constant 0 : i32
    return %c0_i32, %c0_i32_0 : i32, i32
  }
  func.func @transform_6(%arg0: i32) -> (i32, i32, i32) {
    %c0_i32 = arith.constant 0 : i32
    %c0_i32_0 = arith.constant 0 : i32
    %c0_i32_1 = arith.constant 0 : i32
    return %arg0, %c0_i32, %c0_i32_0 : i32, i32, i32
  }
}

</mosaic_0001>

<llo_original>
// kernel: tpu_custom_call.1
$region0: #{tpu_custom_call.1}
  #allocation0 [shape = 'u32[]', space=smem, size = 0x4, offset = 0x4, fixed_abs, tag = 'smem constant byte address 0x4 - core index']
  #allocation1 [shape = 'u32[144,128]{1,0:T(1,128)}', space=vmem, size = 0x12000, scoped, tag = 'internal scratch']
  %s0 = inlined_call_operand.vmem [shape: f32[2,4,256], index: 0, kind: input, shape index: {}]
  %s1 = inlined_call_operand.vmem [shape: f32[9,1,256], index: 1, kind: input, shape index: {}]
  %s2 = inlined_call_operand.vmem [shape: f32[9,4,4], index: 2, kind: input, shape index: {}]
  %s3 = inlined_call_operand.vmem [shape: f32[4,1], index: 3, kind: input, shape index: {}]
  %s4 = inlined_call_operand.vmem [shape: f32[9,4,4], index: 4, kind: input, shape index: {}]
  %s5 = inlined_call_operand.vmem [shape: f32[4,1], index: 5, kind: input, shape index: {}]
  %s6 = inlined_call_operand.hbm [shape: f32[2,4,256], index: 6, kind: output, shape index: {}]
  %s7 = sld [smem:[#allocation0]]
  $region57: #{tpu_custom_call.1} parent=0
    _
  %s9 = ssub.s32 1, %s7
  %s10 = scalar_select 0, %s9, %s7
  $region1: #{tpu_custom_call.1} parent=0
    #allocation2 [shape = 'u8[8192]{0}', space=vmem, size = 0x2000, scoped, tag = 'output window, operand 0']
    #allocation3 [shape = 's32[2]{0}', space=sflag, size = 0x8, scoped, tag = 'scoped memory for tpu_custom_call.1']
    %11 = vsyncpa [#allocation3], 0
    %s12 = scalar_lea.sflag [#allocation3], 1
    %13 = vsyncpa %s12, 0
    loop: start=0, step=1, limit=4
    $region2: #{tpu_custom_call.1} parent=1 // loop_pre_header
      _
    $region3: #{tpu_custom_call.1} parent=1 // loop_header
      %s15 = sphi 0, %s19
      %p16 = scmp.ge.s32.totalorder %s15, 4
      %s25 = sphi 0, %s27
      %s28 = sphi 0, %s25
      %s29 = sphi 0, %s28
      %s45 = sphi 0, %s29
      %s49 = sphi 0, %s49
      %s51 = sphi 0, %s49
      %s52 = sphi 0, %s51
      %s66 = sphi 0, %s52
      %s70 = sphi 0, %s70
      %s72 = sphi 0, %s70
      %s73 = sphi 0, %s72
      %s87 = sphi 0, %s73
      %s91 = sphi 0, %s91
      %s93 = sphi 0, %s91
      %s94 = sphi 0, %s93
      %s108 = sphi 0, %s94
      %s112 = sphi 0, %s112
      %s114 = sphi 0, %s112
      %s115 = sphi 0, %s114
      %s129 = sphi 0, %s115
      %s133 = sphi 0, %s133
      %s135 = sphi 0, %s133
      %s136 = sphi 0, %s135
      %s150 = sphi 0, %s136
      %s156 = sphi 0, %s158
      %s159 = sphi 0, %s156
      %s160 = sphi 0, %s159
      %s176 = sphi 0, %s160
    $region4: #{tpu_custom_call.1} parent=1 // loop_header_branch
      %18 = sbr.rel (%p16) target = $region8
    $region5: #{tpu_custom_call.1} parent=1 // loop_body
      %s20 = ssub.s32 %s15, 1
      %s21 = ssub.s32 %s15, 2
      %s22 = sadd.s32 %s15, 1
      %s23 = ssub.s32 %s15, %s22
      %p24 = scmp.eq.s32.totalorder %s23, 0
      %s26 = sadd.s32 %s25, 1
      %s27 = scalar_select %p24, %s25, %s26
      %p30 = pneg %p24
      %p31 = scmp.eq.s32.totalorder %s15, 1
      %p32 = por %p30, %p31
      %p33 = scmp.ne.s32.totalorder %s25, %s28
      %p34 = scmp.eq.s32.totalorder %s15, 0
      %p35 = por %p33, %p34
      %p36 = scmp.ne.s32.totalorder %s25, %s28
      %p37 = scmp.eq.s32.totalorder %s20, 1
      %p38 = por %p36, %p37
      %p39 = scmp.ne.s32.totalorder %s28, %s29
      %p40 = scmp.eq.s32.totalorder %s20, 0
      %p41 = por %p39, %p40
      %p42 = scmp.ne.s32.totalorder %s28, %s29
      %p43 = scmp.eq.s32.totalorder %s21, 1
      %p44 = por %p42, %p43
      %p46 = scmp.ne.s32.totalorder %s29, %s45
      %p47 = scmp.eq.s32.totalorder %s21, 0
      %p48 = por %p46, %p47
      %s50 = sadd.s32 %s49, 1
      %p53 = scmp.eq.s32.totalorder %s15, 1
      %p54 = scmp.ne.s32.totalorder %s49, %s51
      %p55 = scmp.eq.s32.totalorder %s15, 0
      %p56 = por %p54, %p55
      %p57 = scmp.ne.s32.totalorder %s49, %s51
      %p58 = scmp.eq.s32.totalorder %s20, 1
      %p59 = por %p57, %p58
      %p60 = scmp.ne.s32.totalorder %s51, %s52
      %p61 = scmp.eq.s32.totalorder %s20, 0
      %p62 = por %p60, %p61
      %p63 = scmp.ne.s32.totalorder %s51, %s52
      %p64 = scmp.eq.s32.totalorder %s21, 1
      %p65 = por %p63, %p64
      %p67 = scmp.ne.s32.totalorder %s52, %s66
      %p68 = scmp.eq.s32.totalorder %s21, 0
      %p69 = por %p67, %p68
      %s71 = sadd.s32 %s70, 1
      %p74 = scmp.eq.s32.totalorder %s15, 1
      %p75 = scmp.ne.s32.totalorder %s70, %s72
      %p76 = scmp.eq.s32.totalorder %s15, 0
      %p77 = por %p75, %p76
      %p78 = scmp.ne.s32.totalorder %s70, %s72
      %p79 = scmp.eq.s32.totalorder %s20, 1
      %p80 = por %p78, %p79
      %p81 = scmp.ne.s32.totalorder %s72, %s73
      %p82 = scmp.eq.s32.totalorder %s20, 0
      %p83 = por %p81, %p82
      %p84 = scmp.ne.s32.totalorder %s72, %s73
      %p85 = scmp.eq.s32.totalorder %s21, 1
      %p86 = por %p84, %p85
      %p88 = scmp.ne.s32.totalorder %s73, %s87
      %p89 = scmp.eq.s32.totalorder %s21, 0
      %p90 = por %p88, %p89
      %s92 = sadd.s32 %s91, 1
      %p95 = scmp.eq.s32.totalorder %s15, 1
      %p96 = scmp.ne.s32.totalorder %s91, %s93
      %p97 = scmp.eq.s32.totalorder %s15, 0
      %p98 = por %p96, %p97
      %p99 = scmp.ne.s32.totalorder %s91, %s93
      %p100 = scmp.eq.s32.totalorder %s20, 1
      %p101 = por %p99, %p100
      %p102 = scmp.ne.s32.totalorder %s93, %s94
      %p103 = scmp.eq.s32.totalorder %s20, 0
      %p104 = por %p102, %p103
      %p105 = scmp.ne.s32.totalorder %s93, %s94
      %p106 = scmp.eq.s32.totalorder %s21, 1
      %p107 = por %p105, %p106
      %p109 = scmp.ne.s32.totalorder %s94, %s108
      %p110 = scmp.eq.s32.totalorder %s21, 0
      %p111 = por %p109, %p110
      %s113 = sadd.s32 %s112, 1
      %p116 = scmp.eq.s32.totalorder %s15, 1
      %p117 = scmp.ne.s32.totalorder %s112, %s114
      %p118 = scmp.eq.s32.totalorder %s15, 0
      %p119 = por %p117, %p118
      %p120 = scmp.ne.s32.totalorder %s112, %s114
      %p121 = scmp.eq.s32.totalorder %s20, 1
      %p122 = por %p120, %p121
      %p123 = scmp.ne.s32.totalorder %s114, %s115
      %p124 = scmp.eq.s32.totalorder %s20, 0
      %p125 = por %p123, %p124
      %p126 = scmp.ne.s32.totalorder %s114, %s115
      %p127 = scmp.eq.s32.totalorder %s21, 1
      %p128 = por %p126, %p127
      %p130 = scmp.ne.s32.totalorder %s115, %s129
      %p131 = scmp.eq.s32.totalorder %s21, 0
      %p132 = por %p130, %p131
      %s134 = sadd.s32 %s133, 1
      %p137 = scmp.eq.s32.totalorder %s15, 1
      %p138 = scmp.ne.s32.totalorder %s133, %s135
      %p139 = scmp.eq.s32.totalorder %s15, 0
      %p140 = por %p138, %p139
      %p141 = scmp.ne.s32.totalorder %s133, %s135
      %p142 = scmp.eq.s32.totalorder %s20, 1
      %p143 = por %p141, %p142
      %p144 = scmp.ne.s32.totalorder %s135, %s136
      %p145 = scmp.eq.s32.totalorder %s20, 0
      %p146 = por %p144, %p145
      %p147 = scmp.ne.s32.totalorder %s135, %s136
      %p148 = scmp.eq.s32.totalorder %s21, 1
      %p149 = por %p147, %p148
      %p151 = scmp.ne.s32.totalorder %s136, %s150
      %p152 = scmp.eq.s32.totalorder %s21, 0
      %p153 = por %p151, %p152
      %s154 = ssub.s32 %s15, %s22
      %p155 = scmp.eq.s32.totalorder %s154, 0
      %s157 = sadd.s32 %s156, 1
      %s158 = scalar_select %p155, %s156, %s157
      %p161 = pneg %p155
      %p162 = scmp.eq.s32.totalorder %s15, 1
      %p163 = por %p161, %p162
      %p164 = scmp.ne.s32.totalorder %s156, %s159
      %p165 = scmp.eq.s32.totalorder %s15, 0
      %p166 = por %p164, %p165
      %p167 = scmp.ne.s32.totalorder %s156, %s159
      %p168 = scmp.eq.s32.totalorder %s20, 1
      %p169 = por %p167, %p168
      %p170 = scmp.ne.s32.totalorder %s159, %s160
      %p171 = scmp.eq.s32.totalorder %s20, 0
      %p172 = por %p170, %p171
      %p173 = scmp.ne.s32.totalorder %s159, %s160
      %p174 = scmp.eq.s32.totalorder %s21, 1
      %p175 = por %p173, %p174
      %p177 = scmp.ne.s32.totalorder %s160, %s176
      %p178 = scmp.eq.s32.totalorder %s21, 0
      %p179 = por %p177, %p178
      %p180 = scmp.le.s32.totalorder 1, %s15
      %p181 = scmp.lt.s32.totalorder %s15, 3
      %p182 = pnand %p180, %p181
      %p183 = pneg %p182
      // Predicated region
      $region9: #{tpu_custom_call.1} parent=5 // pred_check
        _
      $region10: #{tpu_custom_call.1} parent=5 // pred_check_branch
        %185 = sbr.rel (%p182) target = $region12
      $region11: #{tpu_custom_call.1} parent=5 // pred_region
        %s186 = ssub.s32 %s15, 1
        // Predicated region
        $region13: #{tpu_custom_call.1} parent=11 // pred_check
          %p187 = pneg %p62
        $region14: #{tpu_custom_call.1} parent=11 // pred_check_branch
          %189 = sbr.rel (%p187) target = $region16
        $region15: #{tpu_custom_call.1} parent=11 // pred_region
          _
        $region16: #{tpu_custom_call.1} parent=11 // pred_fallthru
          _
        // Predicated region
        $region17: #{tpu_custom_call.1} parent=11 // pred_check
          %p190 = pneg %p83
        $region18: #{tpu_custom_call.1} parent=11 // pred_check_branch
          %192 = sbr.rel (%p190) target = $region20
        $region19: #{tpu_custom_call.1} parent=11 // pred_region
          _
        $region20: #{tpu_custom_call.1} parent=11 // pred_fallthru
          _
        // Predicated region
        $region21: #{tpu_custom_call.1} parent=11 // pred_check
          %p193 = pneg %p104
        $region22: #{tpu_custom_call.1} parent=11 // pred_check_branch
          %195 = sbr.rel (%p193) target = $region24
        $region23: #{tpu_custom_call.1} parent=11 // pred_region
          _
        $region24: #{tpu_custom_call.1} parent=11 // pred_fallthru
          _
        // Predicated region
        $region25: #{tpu_custom_call.1} parent=11 // pred_check
          %p196 = pneg %p125
        $region26: #{tpu_custom_call.1} parent=11 // pred_check_branch
          %198 = sbr.rel (%p196) target = $region28
        $region27: #{tpu_custom_call.1} parent=11 // pred_region
          _
        $region28: #{tpu_custom_call.1} parent=11 // pred_fallthru
          _
        // Predicated region
        $region29: #{tpu_custom_call.1} parent=11 // pred_check
          %p199 = pneg %p146
        $region30: #{tpu_custom_call.1} parent=11 // pred_check_branch
          %201 = sbr.rel (%p199) target = $region32
        $region31: #{tpu_custom_call.1} parent=11 // pred_region
          _
        $region32: #{tpu_custom_call.1} parent=11 // pred_fallthru
          _
      $region12: #{tpu_custom_call.1} parent=5 // pred_fallthru
        _
      %p202 = scmp.lt.s32.totalorder %s15, 2
      // Predicated region
      $region33: #{tpu_custom_call.1} parent=5 // pred_check
        %p203 = pneg %p202
      $region34: #{tpu_custom_call.1} parent=5 // pred_check_branch
        %205 = sbr.rel (%p203) target = $region36
      $region35: #{tpu_custom_call.1} parent=5 // pred_region
        // Predicated region
        $region37: #{tpu_custom_call.1} parent=35 // pred_check
          %p206 = pneg %p35
        $region38: #{tpu_custom_call.1} parent=35 // pred_check_branch
          %208 = sbr.rel (%p206) target = $region40
        $region39: #{tpu_custom_call.1} parent=35 // pred_region
          %p209 = scmp.lt.s32.totalorder %s15, 1
          %s210 = scalar_select %p209, %s15, 1
          %s211 = smul.addr %s210, 2
          %s212 = smul.addr %s211, 4
          %s213 = scalar_lea.vmem %s0, %s212
        $region40: #{tpu_custom_call.1} parent=35 // pred_fallthru
          _
      $region36: #{tpu_custom_call.1} parent=5 // pred_fallthru
        _
      %p214 = scmp.le.s32.totalorder 1, %s15
      %p215 = scmp.lt.s32.totalorder %s15, 3
      %p216 = pnand %p214, %p215
      %p217 = pneg %p216
      // Predicated region
      $region41: #{tpu_custom_call.1} parent=5 // pred_check
        _
      $region42: #{tpu_custom_call.1} parent=5 // pred_check_branch
        %219 = sbr.rel (%p216) target = $region44
      $region43: #{tpu_custom_call.1} parent=5 // pred_region
        %s220 = ssub.s32 %s15, 1
        %p221 = scmp.lt.s32.totalorder %s20, 1
        %s222 = scalar_select %p221, %s20, 1
        %s223 = smul.addr %s222, 2
        %s224 = smul.addr %s223, 4
        %s225 = scalar_lea.vmem %s0, %s224
        %p226 = pneg %p41
        %p227 = pneg %p38
        %p228 = pneg %p62
        %p229 = pneg %p59
        %p230 = pneg %p83
        %p231 = pneg %p80
        %p232 = pneg %p104
        %p233 = pneg %p101
        %p234 = pneg %p125
        %p235 = pneg %p122
        %p236 = pneg %p146
        %p237 = pneg %p143
        %p238 = pneg %p172
        %p239 = pneg %p169
        %s240 = sand.u32 %s159, 1
        %s241 = scalar_lea.sflag [#allocation3], %s240
        %s242 = sand.u32 %s159, 1
        %s243 = smul.addr %s242, 8
        %s244 = scalar_lea.vmem [#allocation2], %s243
        %p245 = scmp.lt.s32.totalorder %s20, 1
        %s246 = scalar_select %p245, %s20, 1
        %s247 = smul.addr %s246, 2
        %s248 = smul.addr %s247, 4
        %s249 = scalar_lea.vmem %s0, %s248
        %v250 = vld [vmem:[%s249] sm:$0xff]
        %v252 = vcombine.high %v250, %v250
        %254 = vrot.lane.b32.xlu0 %v250, 17
        %v255 = vpop.permute.xlu0 %254
        %256 = vrot.lane.b32.xlu0 %v252, 17
        %v257 = vpop.permute.xlu0 %256
        %v258 = vlaneseq
        %v259 = vand.u32 %v258, 127
        %vm260 = vcmp.lt.s32.totalorder %v259, 17
        %v261 = vsel %vm260, %v255, %v257
        %v262 = vsel %vm260, %v257, %v255
        %v263 = vld [vmem:[%s1] sm:$0x3]
        %v265 = vlaneseq
        %v266 = vshrl.u32 %v265, 7
        %v267 = vsub.s32 0, %v266
        %v268 = vrot.slane %v263, %v267
        %v269 = vlaneseq
        %v270 = vshrl.u32 %v269, 7
        %v271 = vsub.s32 1, %v270
        %v272 = vrot.slane %v263, %v271
        %v275 = vmul.f32 %v262, %v268
        %v276 = vmul.f32 %v261, %v272
        %v277 = vld [vmem:[%s2] sm:$0xf]
        %278 = vrot.lane.b32.xlu0 %v250, 16
        %v279 = vpop.permute.xlu0 %278
        %280 = vrot.lane.b32.xlu0 %v252, 16
        %v281 = vpop.permute.xlu0 %280
        %vm282 = vcmp.lt.s32.totalorder %v259, 16
        %v283 = vsel %vm282, %v279, %v281
        %v284 = vsel %vm282, %v281, %v279
        %s285 = scalar_lea.vmem %s1, 2
        %v286 = vld [vmem:[%s285] sm:$0x3]
        %v288 = vlaneseq
        %v289 = vshrl.u32 %v288, 7
        %v290 = vsub.s32 0, %v289
        %v291 = vrot.slane %v286, %v290
        %v292 = vlaneseq
        %v293 = vshrl.u32 %v292, 7
        %v294 = vsub.s32 1, %v293
        %v295 = vrot.slane %v286, %v294
        %v298 = vmul.f32 %v284, %v291
        %v299 = vmul.f32 %v283, %v295
        %s300 = scalar_lea.vmem %s2, 4
        %v301 = vld [vmem:[%s300] sm:$0xf]
        %vm302 = vcmask 31744
        %v304 = vsel %vm302, %v301, 0
        %vm306 = vcmask 1043456
        %v308 = vsel %vm306, %v298, 0
        %v311 = vsel %vm306, %v299, 0
        %313 = vmatprep.subr.mxu0 0.0
        %314 = vmatpush1.msra.mxu0 0.0
        %315 = vmatprep.subr.mxu0 0.0
        %316 = vmatpush1.msra.mxu0 0.0
        %317 = vmatprep.subr.mxu0 0.0
        %318 = vmatpush1.msra.mxu0 0.0
        %319 = vmatprep.subr.mxu0 0.0
        %320 = vmatpush1.msra.mxu0 0.0
        %321 = vmatprep.subr.mxu0 0.0
        %322 = vmatpush1.msra.mxu0 0.0
        %323 = vmatprep.subr.mxu0 0.0
        %324 = vmatpush1.msra.mxu0 0.0
        %325 = vmatprep.subr.mxu0 0.0
        %326 = vmatpush1.msra.mxu0 0.0
        %327 = vmatprep.subr.mxu0 0.0
        %328 = vmatpush1.msra.mxu0 0.0
        %329 = vmatprep.subr.mxu0 0.0
        %330 = vmatpush1.msra.mxu0 0.0
        %331 = vmatprep.subr.mxu0 0.0
        %332 = vmatpush1.msra.mxu0 0.0
        %333 = vmatprep.subr.mxu0 0.0
        %334 = vmatpush1.msra.mxu0 0.0
        %335 = vmatprep.subr.mxu0 0.0
        %336 = vmatpush1.msra.mxu0 0.0
        %337 = vmatprep.subr.mxu0 0.0
        %338 = vmatpush1.msra.mxu0 0.0
        %339 = vmatprep.subr.mxu0 0.0
        %340 = vmatpush1.msra.mxu0 0.0
        %341 = vmatprep.subr.mxu0 0.0
        %342 = vmatpush1.msra.mxu0 0.0
        %343 = vmatprep.subr.mxu0 %v311
        %344 = vmatpush1.msra.mxu0 %v308
        %345 = vmatprep.subr.mxu0 0.0
        %346 = vmatpush2.msra.mxu0 0.0
        %347 = vmatprep.subr.mxu0 0.0
        %348 = vmatpush2.msra.mxu0 0.0
        %349 = vmatprep.subr.mxu0 0.0
        %350 = vmatpush2.msra.mxu0 0.0
        %351 = vmatprep.subr.mxu0 0.0
        %352 = vmatpush2.msra.mxu0 0.0
        %353 = vmatprep.subr.mxu0 0.0
        %354 = vmatpush2.msra.mxu0 0.0
        %355 = vmatprep.subr.mxu0 0.0
        %356 = vmatpush2.msra.mxu0 0.0
        %357 = vmatprep.subr.mxu0 0.0
        %358 = vmatpush2.msra.mxu0 0.0
        %359 = vmatprep.subr.mxu0 0.0
        %360 = vmatpush2.msra.mxu0 0.0
        %361 = vmatprep.subr.mxu0 0.0
        %362 = vmatpush2.msra.mxu0 0.0
        %363 = vmatprep.subr.mxu0 0.0
        %364 = vmatpush2.msra.mxu0 0.0
        %365 = vmatprep.subr.mxu0 0.0
        %366 = vmatpush2.msra.mxu0 0.0
        %367 = vmatprep.subr.mxu0 0.0
        %368 = vmatpush2.msra.mxu0 0.0
        %369 = vmatprep.subr.mxu0 0.0
        %370 = vmatpush2.msra.mxu0 0.0
        %371 = vmatprep.subr.mxu0 0.0
        %372 = vmatpush2.msra.mxu0 0.0
        %373 = vmatprep.subr.mxu0 0.0
        %374 = vmatpush2.msra.mxu0 0.0
        %375 = vmatprep.subr.mxu0 0.0
        %376 = vmatpush2.msra.mxu0 0.0
        %377 = vmatprep.mubr.f32.mxu0 0.0
        %378 = vmatmul.mubr.f32.gmra.mxu0 %v304
        %v379 = vpop.f32.mrf.mxu0
        %v380 = vadd.f32 0.0, %v379
        %v381 = vpop.f32.mrf.mxu0
        %v382 = vadd.f32 0.0, %v381
        %383 = vdwg.mxu0
        %v385 = vsel %vm302, %v277, 0
        %v388 = vsel %vm306, %v275, 0
        %v391 = vsel %vm306, %v276, 0
        %393 = vmatprep.subr.mxu0 0.0
        %394 = vmatpush1.msra.mxu0 0.0
        %395 = vmatprep.subr.mxu0 0.0
        %396 = vmatpush1.msra.mxu0 0.0
        %397 = vmatprep.subr.mxu0 0.0
        %398 = vmatpush1.msra.mxu0 0.0
        %399 = vmatprep.subr.mxu0 0.0
        %400 = vmatpush1.msra.mxu0 0.0
        %401 = vmatprep.subr.mxu0 0.0
        %402 = vmatpush1.msra.mxu0 0.0
        %403 = vmatprep.subr.mxu0 0.0
        %404 = vmatpush1.msra.mxu0 0.0
        %405 = vmatprep.subr.mxu0 0.0
        %406 = vmatpush1.msra.mxu0 0.0
        %407 = vmatprep.subr.mxu0 0.0
        %408 = vmatpush1.msra.mxu0 0.0
        %409 = vmatprep.subr.mxu0 0.0
        %410 = vmatpush1.msra.mxu0 0.0
        %411 = vmatprep.subr.mxu0 0.0
        %412 = vmatpush1.msra.mxu0 0.0
        %413 = vmatprep.subr.mxu0 0.0
        %414 = vmatpush1.msra.mxu0 0.0
        %415 = vmatprep.subr.mxu0 0.0
        %416 = vmatpush1.msra.mxu0 0.0
        %417 = vmatprep.subr.mxu0 0.0
        %418 = vmatpush1.msra.mxu0 0.0
        %419 = vmatprep.subr.mxu0 0.0
        %420 = vmatpush1.msra.mxu0 0.0
        %421 = vmatprep.subr.mxu0 0.0
        %422 = vmatpush1.msra.mxu0 0.0
        %423 = vmatprep.subr.mxu0 %v391
        %424 = vmatpush1.msra.mxu0 %v388
        %425 = vmatprep.subr.mxu0 0.0
        %426 = vmatpush2.msra.mxu0 0.0
        %427 = vmatprep.subr.mxu0 0.0
        %428 = vmatpush2.msra.mxu0 0.0
        %429 = vmatprep.subr.mxu0 0.0
        %430 = vmatpush2.msra.mxu0 0.0
        %431 = vmatprep.subr.mxu0 0.0
        %432 = vmatpush2.msra.mxu0 0.0
        %433 = vmatprep.subr.mxu0 0.0
        %434 = vmatpush2.msra.mxu0 0.0
        %435 = vmatprep.subr.mxu0 0.0
        %436 = vmatpush2.msra.mxu0 0.0
        %437 = vmatprep.subr.mxu0 0.0
        %438 = vmatpush2.msra.mxu0 0.0
        %439 = vmatprep.subr.mxu0 0.0
        %440 = vmatpush2.msra.mxu0 0.0
        %441 = vmatprep.subr.mxu0 0.0
        %442 = vmatpush2.msra.mxu0 0.0
        %443 = vmatprep.subr.mxu0 0.0
        %444 = vmatpush2.msra.mxu0 0.0
        %445 = vmatprep.subr.mxu0 0.0
        %446 = vmatpush2.msra.mxu0 0.0
        %447 = vmatprep.subr.mxu0 0.0
        %448 = vmatpush2.msra.mxu0 0.0
        %449 = vmatprep.subr.mxu0 0.0
        %450 = vmatpush2.msra.mxu0 0.0
        %451 = vmatprep.subr.mxu0 0.0
        %452 = vmatpush2.msra.mxu0 0.0
        %453 = vmatprep.subr.mxu0 0.0
        %454 = vmatpush2.msra.mxu0 0.0
        %455 = vmatprep.subr.mxu0 0.0
        %456 = vmatpush2.msra.mxu0 0.0
        %457 = vmatprep.mubr.f32.mxu0 0.0
        %458 = vmatmul.mubr.f32.gmra.mxu0 %v385
        %v459 = vpop.f32.mrf.mxu0
        %v460 = vadd.f32 %v380, %v459
        %v461 = vpop.f32.mrf.mxu0
        %v462 = vadd.f32 %v382, %v461
        %463 = vdwg.mxu0
        %464 = vrot.lane.b32.xlu0 %v250, 15
        %v465 = vpop.permute.xlu0 %464
        %466 = vrot.lane.b32.xlu0 %v252, 15
        %v467 = vpop.permute.xlu0 %466
        %vm468 = vcmp.lt.s32.totalorder %v259, 15
        %v469 = vsel %vm468, %v465, %v467
        %v470 = vsel %vm468, %v467, %v465
        %s471 = scalar_lea.vmem %s1, 4
        %v472 = vld [vmem:[%s471] sm:$0x3]
        %v474 = vlaneseq
        %v475 = vshrl.u32 %v474, 7
        %v476 = vsub.s32 0, %v475
        %v477 = vrot.slane %v472, %v476
        %v478 = vlaneseq
        %v479 = vshrl.u32 %v478, 7
        %v480 = vsub.s32 1, %v479
        %v481 = vrot.slane %v472, %v480
        %v484 = vmul.f32 %v470, %v477
        %v485 = vmul.f32 %v469, %v481
        %s486 = scalar_lea.vmem %s2, 8
        %v487 = vld [vmem:[%s486] sm:$0xf]
        %v489 = vsel %vm302, %v487, 0
        %v492 = vsel %vm306, %v484, 0
        %v495 = vsel %vm306, %v485, 0
        %497 = vmatprep.subr.mxu0 0.0
        %498 = vmatpush1.msra.mxu0 0.0
        %499 = vmatprep.subr.mxu0 0.0
        %500 = vmatpush1.msra.mxu0 0.0
        %501 = vmatprep.subr.mxu0 0.0
        %502 = vmatpush1.msra.mxu0 0.0
        %503 = vmatprep.subr.mxu0 0.0
        %504 = vmatpush1.msra.mxu0 0.0
        %505 = vmatprep.subr.mxu0 0.0
        %506 = vmatpush1.msra.mxu0 0.0
        %507 = vmatprep.subr.mxu0 0.0
        %508 = vmatpush1.msra.mxu0 0.0
        %509 = vmatprep.subr.mxu0 0.0
        %510 = vmatpush1.msra.mxu0 0.0
        %511 = vmatprep.subr.mxu0 0.0
        %512 = vmatpush1.msra.mxu0 0.0
        %513 = vmatprep.subr.mxu0 0.0
        %514 = vmatpush1.msra.mxu0 0.0
        %515 = vmatprep.subr.mxu0 0.0
        %516 = vmatpush1.msra.mxu0 0.0
        %517 = vmatprep.subr.mxu0 0.0
        %518 = vmatpush1.msra.mxu0 0.0
        %519 = vmatprep.subr.mxu0 0.0
        %520 = vmatpush1.msra.mxu0 0.0
        %521 = vmatprep.subr.mxu0 0.0
        %522 = vmatpush1.msra.mxu0 0.0
        %523 = vmatprep.subr.mxu0 0.0
        %524 = vmatpush1.msra.mxu0 0.0
        %525 = vmatprep.subr.mxu0 0.0
        %526 = vmatpush1.msra.mxu0 0.0
        %527 = vmatprep.subr.mxu0 %v495
        %528 = vmatpush1.msra.mxu0 %v492
        %529 = vmatprep.subr.mxu0 0.0
        %530 = vmatpush2.msra.mxu0 0.0
        %531 = vmatprep.subr.mxu0 0.0
        %532 = vmatpush2.msra.mxu0 0.0
        %533 = vmatprep.subr.mxu0 0.0
        %534 = vmatpush2.msra.mxu0 0.0
        %535 = vmatprep.subr.mxu0 0.0
        %536 = vmatpush2.msra.mxu0 0.0
        %537 = vmatprep.subr.mxu0 0.0
        %538 = vmatpush2.msra.mxu0 0.0
        %539 = vmatprep.subr.mxu0 0.0
        %540 = vmatpush2.msra.mxu0 0.0
        %541 = vmatprep.subr.mxu0 0.0
        %542 = vmatpush2.msra.mxu0 0.0
        %543 = vmatprep.subr.mxu0 0.0
        %544 = vmatpush2.msra.mxu0 0.0
        %545 = vmatprep.subr.mxu0 0.0
        %546 = vmatpush2.msra.mxu0 0.0
        %547 = vmatprep.subr.mxu0 0.0
        %548 = vmatpush2.msra.mxu0 0.0
        %549 = vmatprep.subr.mxu0 0.0
        %550 = vmatpush2.msra.mxu0 0.0
        %551 = vmatprep.subr.mxu0 0.0
        %552 = vmatpush2.msra.mxu0 0.0
        %553 = vmatprep.subr.mxu0 0.0
        %554 = vmatpush2.msra.mxu0 0.0
        %555 = vmatprep.subr.mxu0 0.0
        %556 = vmatpush2.msra.mxu0 0.0
        %557 = vmatprep.subr.mxu0 0.0
        %558 = vmatpush2.msra.mxu0 0.0
        %559 = vmatprep.subr.mxu0 0.0
        %560 = vmatpush2.msra.mxu0 0.0
        %561 = vmatprep.mubr.f32.mxu0 0.0
        %562 = vmatmul.mubr.f32.gmra.mxu0 %v489
        %v563 = vpop.f32.mrf.mxu0
        %v564 = vadd.f32 0.0, %v563
        %v565 = vpop.f32.mrf.mxu0
        %v566 = vadd.f32 0.0, %v565
        %567 = vdwg.mxu0
        %v568 = vadd.f32 %v460, %v564
        %v569 = vadd.f32 %v462, %v566
        %570 = vrot.lane.b32.xlu0 %v250, 1
        %v571 = vpop.permute.xlu0 %570
        %572 = vrot.lane.b32.xlu0 %v252, 1
        %v573 = vpop.permute.xlu0 %572
        %vm574 = vcmp.lt.s32.totalorder %v259, 1
        %v575 = vsel %vm574, %v571, %v573
        %v576 = vsel %vm574, %v573, %v571
        %s577 = scalar_lea.vmem %s1, 6
        %v578 = vld [vmem:[%s577] sm:$0x3]
        %v580 = vlaneseq
        %v581 = vshrl.u32 %v580, 7
        %v582 = vsub.s32 0, %v581
        %v583 = vrot.slane %v578, %v582
        %v584 = vlaneseq
        %v585 = vshrl.u32 %v584, 7
        %v586 = vsub.s32 1, %v585
        %v587 = vrot.slane %v578, %v586
        %v590 = vmul.f32 %v576, %v583
        %v591 = vmul.f32 %v575, %v587
        %s592 = scalar_lea.vmem %s2, 12
        %v593 = vld [vmem:[%s592] sm:$0xf]
        %v595 = vsel %vm302, %v593, 0
        %v598 = vsel %vm306, %v590, 0
        %v601 = vsel %vm306, %v591, 0
        %603 = vmatprep.subr.mxu0 0.0
        %604 = vmatpush1.msra.mxu0 0.0
        %605 = vmatprep.subr.mxu0 0.0
        %606 = vmatpush1.msra.mxu0 0.0
        %607 = vmatprep.subr.mxu0 0.0
        %608 = vmatpush1.msra.mxu0 0.0
        %609 = vmatprep.subr.mxu0 0.0
        %610 = vmatpush1.msra.mxu0 0.0
        %611 = vmatprep.subr.mxu0 0.0
        %612 = vmatpush1.msra.mxu0 0.0
        %613 = vmatprep.subr.mxu0 0.0
        %614 = vmatpush1.msra.mxu0 0.0
        %615 = vmatprep.subr.mxu0 0.0
        %616 = vmatpush1.msra.mxu0 0.0
        %617 = vmatprep.subr.mxu0 0.0
        %618 = vmatpush1.msra.mxu0 0.0
        %619 = vmatprep.subr.mxu0 0.0
        %620 = vmatpush1.msra.mxu0 0.0
        %621 = vmatprep.subr.mxu0 0.0
        %622 = vmatpush1.msra.mxu0 0.0
        %623 = vmatprep.subr.mxu0 0.0
        %624 = vmatpush1.msra.mxu0 0.0
        %625 = vmatprep.subr.mxu0 0.0
        %626 = vmatpush1.msra.mxu0 0.0
        %627 = vmatprep.subr.mxu0 0.0
        %628 = vmatpush1.msra.mxu0 0.0
        %629 = vmatprep.subr.mxu0 0.0
        %630 = vmatpush1.msra.mxu0 0.0
        %631 = vmatprep.subr.mxu0 0.0
        %632 = vmatpush1.msra.mxu0 0.0
        %633 = vmatprep.subr.mxu0 %v601
        %634 = vmatpush1.msra.mxu0 %v598
        %635 = vmatprep.subr.mxu0 0.0
        %636 = vmatpush2.msra.mxu0 0.0
        %637 = vmatprep.subr.mxu0 0.0
        %638 = vmatpush2.msra.mxu0 0.0
        %639 = vmatprep.subr.mxu0 0.0
        %640 = vmatpush2.msra.mxu0 0.0
        %641 = vmatprep.subr.mxu0 0.0
        %642 = vmatpush2.msra.mxu0 0.0
        %643 = vmatprep.subr.mxu0 0.0
        %644 = vmatpush2.msra.mxu0 0.0
        %645 = vmatprep.subr.mxu0 0.0
        %646 = vmatpush2.msra.mxu0 0.0
        %647 = vmatprep.subr.mxu0 0.0
        %648 = vmatpush2.msra.mxu0 0.0
        %649 = vmatprep.subr.mxu0 0.0
        %650 = vmatpush2.msra.mxu0 0.0
        %651 = vmatprep.subr.mxu0 0.0
        %652 = vmatpush2.msra.mxu0 0.0
        %653 = vmatprep.subr.mxu0 0.0
        %654 = vmatpush2.msra.mxu0 0.0
        %655 = vmatprep.subr.mxu0 0.0
        %656 = vmatpush2.msra.mxu0 0.0
        %657 = vmatprep.subr.mxu0 0.0
        %658 = vmatpush2.msra.mxu0 0.0
        %659 = vmatprep.subr.mxu0 0.0
        %660 = vmatpush2.msra.mxu0 0.0
        %661 = vmatprep.subr.mxu0 0.0
        %662 = vmatpush2.msra.mxu0 0.0
        %663 = vmatprep.subr.mxu0 0.0
        %664 = vmatpush2.msra.mxu0 0.0
        %665 = vmatprep.subr.mxu0 0.0
        %666 = vmatpush2.msra.mxu0 0.0
        %667 = vmatprep.mubr.f32.mxu0 0.0
        %668 = vmatmul.mubr.f32.gmra.mxu0 %v595
        %v669 = vpop.f32.mrf.mxu0
        %v670 = vadd.f32 0.0, %v669
        %v671 = vpop.f32.mrf.mxu0
        %v672 = vadd.f32 0.0, %v671
        %673 = vdwg.mxu0
        %v674 = vadd.f32 %v568, %v670
        %v675 = vadd.f32 %v569, %v672
        %s676 = scalar_lea.vmem %s2, 16
        %v677 = vld [vmem:[%s676] sm:$0xf]
        %v679 = vsel %vm302, %v677, 0
        %v681 = vsel %vm306, %v250, 0
        %v683 = vsel %vm306, %v252, 0
        %685 = vmatprep.subr.mxu0 0.0
        %686 = vmatpush1.msra.mxu0 0.0
        %687 = vmatprep.subr.mxu0 0.0
        %688 = vmatpush1.msra.mxu0 0.0
        %689 = vmatprep.subr.mxu0 0.0
        %690 = vmatpush1.msra.mxu0 0.0
        %691 = vmatprep.subr.mxu0 0.0
        %692 = vmatpush1.msra.mxu0 0.0
        %693 = vmatprep.subr.mxu0 0.0
        %694 = vmatpush1.msra.mxu0 0.0
        %695 = vmatprep.subr.mxu0 0.0
        %696 = vmatpush1.msra.mxu0 0.0
        %697 = vmatprep.subr.mxu0 0.0
        %698 = vmatpush1.msra.mxu0 0.0
        %699 = vmatprep.subr.mxu0 0.0
        %700 = vmatpush1.msra.mxu0 0.0
        %701 = vmatprep.subr.mxu0 0.0
        %702 = vmatpush1.msra.mxu0 0.0
        %703 = vmatprep.subr.mxu0 0.0
        %704 = vmatpush1.msra.mxu0 0.0
        %705 = vmatprep.subr.mxu0 0.0
        %706 = vmatpush1.msra.mxu0 0.0
        %707 = vmatprep.subr.mxu0 0.0
        %708 = vmatpush1.msra.mxu0 0.0
        %709 = vmatprep.subr.mxu0 0.0
        %710 = vmatpush1.msra.mxu0 0.0
        %711 = vmatprep.subr.mxu0 0.0
        %712 = vmatpush1.msra.mxu0 0.0
        %713 = vmatprep.subr.mxu0 0.0
        %714 = vmatpush1.msra.mxu0 0.0
        %715 = vmatprep.subr.mxu0 %v683
        %716 = vmatpush1.msra.mxu0 %v681
        %717 = vmatprep.subr.mxu0 0.0
        %718 = vmatpush2.msra.mxu0 0.0
        %719 = vmatprep.subr.mxu0 0.0
        %720 = vmatpush2.msra.mxu0 0.0
        %721 = vmatprep.subr.mxu0 0.0
        %722 = vmatpush2.msra.mxu0 0.0
        %723 = vmatprep.subr.mxu0 0.0
        %724 = vmatpush2.msra.mxu0 0.0
        %725 = vmatprep.subr.mxu0 0.0
        %726 = vmatpush2.msra.mxu0 0.0
        %727 = vmatprep.subr.mxu0 0.0
        %728 = vmatpush2.msra.mxu0 0.0
        %729 = vmatprep.subr.mxu0 0.0
        %730 = vmatpush2.msra.mxu0 0.0
        %731 = vmatprep.subr.mxu0 0.0
        %732 = vmatpush2.msra.mxu0 0.0
        %733 = vmatprep.subr.mxu0 0.0
        %734 = vmatpush2.msra.mxu0 0.0
        %735 = vmatprep.subr.mxu0 0.0
        %736 = vmatpush2.msra.mxu0 0.0
        %737 = vmatprep.subr.mxu0 0.0
        %738 = vmatpush2.msra.mxu0 0.0
        %739 = vmatprep.subr.mxu0 0.0
        %740 = vmatpush2.msra.mxu0 0.0
        %741 = vmatprep.subr.mxu0 0.0
        %742 = vmatpush2.msra.mxu0 0.0
        %743 = vmatprep.subr.mxu0 0.0
        %744 = vmatpush2.msra.mxu0 0.0
        %745 = vmatprep.subr.mxu0 0.0
        %746 = vmatpush2.msra.mxu0 0.0
        %747 = vmatprep.subr.mxu0 0.0
        %748 = vmatpush2.msra.mxu0 0.0
        %749 = vmatprep.mubr.f32.mxu0 0.0
        %750 = vmatmul.mubr.f32.gmra.mxu0 %v679
        %v751 = vpop.f32.mrf.mxu0
        %v752 = vadd.f32 0.0, %v751
        %v753 = vpop.f32.mrf.mxu0
        %v754 = vadd.f32 0.0, %v753
        %755 = vdwg.mxu0
        %v756 = vadd.f32 %v674, %v752
        %v757 = vadd.f32 %v675, %v754
        %758 = vrot.lane.b32.xlu0 %v250, 127
        %v759 = vpop.permute.xlu0 %758
        %760 = vrot.lane.b32.xlu0 %v252, 127
        %v761 = vpop.permute.xlu0 %760
        %vm762 = vcmp.lt.s32.totalorder %v259, 127
        %v763 = vsel %vm762, %v759, %v761
        %v764 = vsel %vm762, %v761, %v759
        %s765 = scalar_lea.vmem %s1, 10
        %v766 = vld [vmem:[%s765] sm:$0x3]
        %v768 = vlaneseq
        %v769 = vshrl.u32 %v768, 7
        %v770 = vsub.s32 0, %v769
        %v771 = vrot.slane %v766, %v770
        %v772 = vlaneseq
        %v773 = vshrl.u32 %v772, 7
        %v774 = vsub.s32 1, %v773
        %v775 = vrot.slane %v766, %v774
        %v778 = vmul.f32 %v763, %v771
        %v779 = vmul.f32 %v764, %v775
        %s780 = scalar_lea.vmem %s2, 20
        %v781 = vld [vmem:[%s780] sm:$0xf]
        %v783 = vsel %vm302, %v781, 0
        %v786 = vsel %vm306, %v778, 0
        %v789 = vsel %vm306, %v779, 0
        %791 = vmatprep.subr.mxu0 0.0
        %792 = vmatpush1.msra.mxu0 0.0
        %793 = vmatprep.subr.mxu0 0.0
        %794 = vmatpush1.msra.mxu0 0.0
        %795 = vmatprep.subr.mxu0 0.0
        %796 = vmatpush1.msra.mxu0 0.0
        %797 = vmatprep.subr.mxu0 0.0
        %798 = vmatpush1.msra.mxu0 0.0
        %799 = vmatprep.subr.mxu0 0.0
        %800 = vmatpush1.msra.mxu0 0.0
        %801 = vmatprep.subr.mxu0 0.0
        %802 = vmatpush1.msra.mxu0 0.0
        %803 = vmatprep.subr.mxu0 0.0
        %804 = vmatpush1.msra.mxu0 0.0
        %805 = vmatprep.subr.mxu0 0.0
        %806 = vmatpush1.msra.mxu0 0.0
        %807 = vmatprep.subr.mxu0 0.0
        %808 = vmatpush1.msra.mxu0 0.0
        %809 = vmatprep.subr.mxu0 0.0
        %810 = vmatpush1.msra.mxu0 0.0
        %811 = vmatprep.subr.mxu0 0.0
        %812 = vmatpush1.msra.mxu0 0.0
        %813 = vmatprep.subr.mxu0 0.0
        %814 = vmatpush1.msra.mxu0 0.0
        %815 = vmatprep.subr.mxu0 0.0
        %816 = vmatpush1.msra.mxu0 0.0
        %817 = vmatprep.subr.mxu0 0.0
        %818 = vmatpush1.msra.mxu0 0.0
        %819 = vmatprep.subr.mxu0 0.0
        %820 = vmatpush1.msra.mxu0 0.0
        %821 = vmatprep.subr.mxu0 %v789
        %822 = vmatpush1.msra.mxu0 %v786
        %823 = vmatprep.subr.mxu0 0.0
        %824 = vmatpush2.msra.mxu0 0.0
        %825 = vmatprep.subr.mxu0 0.0
        %826 = vmatpush2.msra.mxu0 0.0
        %827 = vmatprep.subr.mxu0 0.0
        %828 = vmatpush2.msra.mxu0 0.0
        %829 = vmatprep.subr.mxu0 0.0
        %830 = vmatpush2.msra.mxu0 0.0
        %831 = vmatprep.subr.mxu0 0.0
        %832 = vmatpush2.msra.mxu0 0.0
        %833 = vmatprep.subr.mxu0 0.0
        %834 = vmatpush2.msra.mxu0 0.0
        %835 = vmatprep.subr.mxu0 0.0
        %836 = vmatpush2.msra.mxu0 0.0
        %837 = vmatprep.subr.mxu0 0.0
        %838 = vmatpush2.msra.mxu0 0.0
        %839 = vmatprep.subr.mxu0 0.0
        %840 = vmatpush2.msra.mxu0 0.0
        %841 = vmatprep.subr.mxu0 0.0
        %842 = vmatpush2.msra.mxu0 0.0
        %843 = vmatprep.subr.mxu0 0.0
        %844 = vmatpush2.msra.mxu0 0.0
        %845 = vmatprep.subr.mxu0 0.0
        %846 = vmatpush2.msra.mxu0 0.0
        %847 = vmatprep.subr.mxu0 0.0
        %848 = vmatpush2.msra.mxu0 0.0
        %849 = vmatprep.subr.mxu0 0.0
        %850 = vmatpush2.msra.mxu0 0.0
        %851 = vmatprep.subr.mxu0 0.0
        %852 = vmatpush2.msra.mxu0 0.0
        %853 = vmatprep.subr.mxu0 0.0
        %854 = vmatpush2.msra.mxu0 0.0
        %855 = vmatprep.mubr.f32.mxu0 0.0
        %856 = vmatmul.mubr.f32.gmra.mxu0 %v783
        %v857 = vpop.f32.mrf.mxu0
        %v858 = vadd.f32 0.0, %v857
        %v859 = vpop.f32.mrf.mxu0
        %v860 = vadd.f32 0.0, %v859
        %861 = vdwg.mxu0
        %v862 = vadd.f32 %v756, %v858
        %v863 = vadd.f32 %v757, %v860
        %864 = vrot.lane.b32.xlu0 %v250, 113
        %v865 = vpop.permute.xlu0 %864
        %866 = vrot.lane.b32.xlu0 %v252, 113
        %v867 = vpop.permute.xlu0 %866
        %vm868 = vcmp.lt.s32.totalorder %v259, 113
        %v869 = vsel %vm868, %v865, %v867
        %v870 = vsel %vm868, %v867, %v865
        %s871 = scalar_lea.vmem %s1, 12
        %v872 = vld [vmem:[%s871] sm:$0x3]
        %v874 = vlaneseq
        %v875 = vshrl.u32 %v874, 7
        %v876 = vsub.s32 0, %v875
        %v877 = vrot.slane %v872, %v876
        %v878 = vlaneseq
        %v879 = vshrl.u32 %v878, 7
        %v880 = vsub.s32 1, %v879
        %v881 = vrot.slane %v872, %v880
        %v884 = vmul.f32 %v869, %v877
        %v885 = vmul.f32 %v870, %v881
        %s886 = scalar_lea.vmem %s2, 24
        %v887 = vld [vmem:[%s886] sm:$0xf]
        %v889 = vsel %vm302, %v887, 0
        %v892 = vsel %vm306, %v884, 0
        %v895 = vsel %vm306, %v885, 0
        %897 = vmatprep.subr.mxu0 0.0
        %898 = vmatpush1.msra.mxu0 0.0
        %899 = vmatprep.subr.mxu0 0.0
        %900 = vmatpush1.msra.mxu0 0.0
        %901 = vmatprep.subr.mxu0 0.0
        %902 = vmatpush1.msra.mxu0 0.0
        %903 = vmatprep.subr.mxu0 0.0
        %904 = vmatpush1.msra.mxu0 0.0
        %905 = vmatprep.subr.mxu0 0.0
        %906 = vmatpush1.msra.mxu0 0.0
        %907 = vmatprep.subr.mxu0 0.0
        %908 = vmatpush1.msra.mxu0 0.0
        %909 = vmatprep.subr.mxu0 0.0
        %910 = vmatpush1.msra.mxu0 0.0
        %911 = vmatprep.subr.mxu0 0.0
        %912 = vmatpush1.msra.mxu0 0.0
        %913 = vmatprep.subr.mxu0 0.0
        %914 = vmatpush1.msra.mxu0 0.0
        %915 = vmatprep.subr.mxu0 0.0
        %916 = vmatpush1.msra.mxu0 0.0
        %917 = vmatprep.subr.mxu0 0.0
        %918 = vmatpush1.msra.mxu0 0.0
        %919 = vmatprep.subr.mxu0 0.0
        %920 = vmatpush1.msra.mxu0 0.0
        %921 = vmatprep.subr.mxu0 0.0
        %922 = vmatpush1.msra.mxu0 0.0
        %923 = vmatprep.subr.mxu0 0.0
        %924 = vmatpush1.msra.mxu0 0.0
        %925 = vmatprep.subr.mxu0 0.0
        %926 = vmatpush1.msra.mxu0 0.0
        %927 = vmatprep.subr.mxu0 %v895
        %928 = vmatpush1.msra.mxu0 %v892
        %929 = vmatprep.subr.mxu0 0.0
        %930 = vmatpush2.msra.mxu0 0.0
        %931 = vmatprep.subr.mxu0 0.0
        %932 = vmatpush2.msra.mxu0 0.0
        %933 = vmatprep.subr.mxu0 0.0
        %934 = vmatpush2.msra.mxu0 0.0
        %935 = vmatprep.subr.mxu0 0.0
        %936 = vmatpush2.msra.mxu0 0.0
        %937 = vmatprep.subr.mxu0 0.0
        %938 = vmatpush2.msra.mxu0 0.0
        %939 = vmatprep.subr.mxu0 0.0
        %940 = vmatpush2.msra.mxu0 0.0
        %941 = vmatprep.subr.mxu0 0.0
        %942 = vmatpush2.msra.mxu0 0.0
        %943 = vmatprep.subr.mxu0 0.0
        %944 = vmatpush2.msra.mxu0 0.0
        %945 = vmatprep.subr.mxu0 0.0
        %946 = vmatpush2.msra.mxu0 0.0
        %947 = vmatprep.subr.mxu0 0.0
        %948 = vmatpush2.msra.mxu0 0.0
        %949 = vmatprep.subr.mxu0 0.0
        %950 = vmatpush2.msra.mxu0 0.0
        %951 = vmatprep.subr.mxu0 0.0
        %952 = vmatpush2.msra.mxu0 0.0
        %953 = vmatprep.subr.mxu0 0.0
        %954 = vmatpush2.msra.mxu0 0.0
        %955 = vmatprep.subr.mxu0 0.0
        %956 = vmatpush2.msra.mxu0 0.0
        %957 = vmatprep.subr.mxu0 0.0
        %958 = vmatpush2.msra.mxu0 0.0
        %959 = vmatprep.subr.mxu0 0.0
        %960 = vmatpush2.msra.mxu0 0.0
        %961 = vmatprep.mubr.f32.mxu0 0.0
        %962 = vmatmul.mubr.f32.gmra.mxu0 %v889
        %v963 = vpop.f32.mrf.mxu0
        %v964 = vadd.f32 0.0, %v963
        %v965 = vpop.f32.mrf.mxu0
        %v966 = vadd.f32 0.0, %v965
        %967 = vdwg.mxu0
        %v968 = vadd.f32 %v862, %v964
        %v969 = vadd.f32 %v863, %v966
        %970 = vrot.lane.b32.xlu0 %v250, 112
        %v971 = vpop.permute.xlu0 %970
        %972 = vrot.lane.b32.xlu0 %v252, 112
        %v973 = vpop.permute.xlu0 %972
        %vm974 = vcmp.lt.s32.totalorder %v259, 112
        %v975 = vsel %vm974, %v971, %v973
        %v976 = vsel %vm974, %v973, %v971
        %s977 = scalar_lea.vmem %s1, 14
        %v978 = vld [vmem:[%s977] sm:$0x3]
        %v980 = vlaneseq
        %v981 = vshrl.u32 %v980, 7
        %v982 = vsub.s32 0, %v981
        %v983 = vrot.slane %v978, %v982
        %v984 = vlaneseq
        %v985 = vshrl.u32 %v984, 7
        %v986 = vsub.s32 1, %v985
        %v987 = vrot.slane %v978, %v986
        %v990 = vmul.f32 %v975, %v983
        %v991 = vmul.f32 %v976, %v987
        %s992 = scalar_lea.vmem %s2, 28
        %v993 = vld [vmem:[%s992] sm:$0xf]
        %v995 = vsel %vm302, %v993, 0
        %v998 = vsel %vm306, %v990, 0
        %v1001 = vsel %vm306, %v991, 0
        %1003 = vmatprep.subr.mxu0 0.0
        %1004 = vmatpush1.msra.mxu0 0.0
        %1005 = vmatprep.subr.mxu0 0.0
        %1006 = vmatpush1.msra.mxu0 0.0
        %1007 = vmatprep.subr.mxu0 0.0
        %1008 = vmatpush1.msra.mxu0 0.0
        %1009 = vmatprep.subr.mxu0 0.0
        %1010 = vmatpush1.msra.mxu0 0.0
        %1011 = vmatprep.subr.mxu0 0.0
        %1012 = vmatpush1.msra.mxu0 0.0
        %1013 = vmatprep.subr.mxu0 0.0
        %1014 = vmatpush1.msra.mxu0 0.0
        %1015 = vmatprep.subr.mxu0 0.0
        %1016 = vmatpush1.msra.mxu0 0.0
        %1017 = vmatprep.subr.mxu0 0.0
        %1018 = vmatpush1.msra.mxu0 0.0
        %1019 = vmatprep.subr.mxu0 0.0
        %1020 = vmatpush1.msra.mxu0 0.0
        %1021 = vmatprep.subr.mxu0 0.0
        %1022 = vmatpush1.msra.mxu0 0.0
        %1023 = vmatprep.subr.mxu0 0.0
        %1024 = vmatpush1.msra.mxu0 0.0
        %1025 = vmatprep.subr.mxu0 0.0
        %1026 = vmatpush1.msra.mxu0 0.0
        %1027 = vmatprep.subr.mxu0 0.0
        %1028 = vmatpush1.msra.mxu0 0.0
        %1029 = vmatprep.subr.mxu0 0.0
        %1030 = vmatpush1.msra.mxu0 0.0
        %1031 = vmatprep.subr.mxu0 0.0
        %1032 = vmatpush1.msra.mxu0 0.0
        %1033 = vmatprep.subr.mxu0 %v1001
        %1034 = vmatpush1.msra.mxu0 %v998
        %1035 = vmatprep.subr.mxu0 0.0
        %1036 = vmatpush2.msra.mxu0 0.0
        %1037 = vmatprep.subr.mxu0 0.0
        %1038 = vmatpush2.msra.mxu0 0.0
        %1039 = vmatprep.subr.mxu0 0.0
        %1040 = vmatpush2.msra.mxu0 0.0
        %1041 = vmatprep.subr.mxu0 0.0
        %1042 = vmatpush2.msra.mxu0 0.0
        %1043 = vmatprep.subr.mxu0 0.0
        %1044 = vmatpush2.msra.mxu0 0.0
        %1045 = vmatprep.subr.mxu0 0.0
        %1046 = vmatpush2.msra.mxu0 0.0
        %1047 = vmatprep.subr.mxu0 0.0
        %1048 = vmatpush2.msra.mxu0 0.0
        %1049 = vmatprep.subr.mxu0 0.0
        %1050 = vmatpush2.msra.mxu0 0.0
        %1051 = vmatprep.subr.mxu0 0.0
        %1052 = vmatpush2.msra.mxu0 0.0
        %1053 = vmatprep.subr.mxu0 0.0
        %1054 = vmatpush2.msra.mxu0 0.0
        %1055 = vmatprep.subr.mxu0 0.0
        %1056 = vmatpush2.msra.mxu0 0.0
        %1057 = vmatprep.subr.mxu0 0.0
        %1058 = vmatpush2.msra.mxu0 0.0
        %1059 = vmatprep.subr.mxu0 0.0
        %1060 = vmatpush2.msra.mxu0 0.0
        %1061 = vmatprep.subr.mxu0 0.0
        %1062 = vmatpush2.msra.mxu0 0.0
        %1063 = vmatprep.subr.mxu0 0.0
        %1064 = vmatpush2.msra.mxu0 0.0
        %1065 = vmatprep.subr.mxu0 0.0
        %1066 = vmatpush2.msra.mxu0 0.0
        %1067 = vmatprep.mubr.f32.mxu0 0.0
        %1068 = vmatmul.mubr.f32.gmra.mxu0 %v995
        %v1069 = vpop.f32.mrf.mxu0
        %v1070 = vadd.f32 0.0, %v1069
        %v1071 = vpop.f32.mrf.mxu0
        %v1072 = vadd.f32 0.0, %v1071
        %1073 = vdwg.mxu0
        %v1074 = vadd.f32 %v968, %v1070
        %v1075 = vadd.f32 %v969, %v1072
        %1076 = vrot.lane.b32.xlu0 %v250, 111
        %v1077 = vpop.permute.xlu0 %1076
        %1078 = vrot.lane.b32.xlu0 %v252, 111
        %v1079 = vpop.permute.xlu0 %1078
        %vm1080 = vcmp.lt.s32.totalorder %v259, 111
        %v1081 = vsel %vm1080, %v1077, %v1079
        %v1082 = vsel %vm1080, %v1079, %v1077
        %s1083 = scalar_lea.vmem %s1, 16
        %v1084 = vld [vmem:[%s1083] sm:$0x3]
        %v1086 = vlaneseq
        %v1087 = vshrl.u32 %v1086, 7
        %v1088 = vsub.s32 0, %v1087
        %v1089 = vrot.slane %v1084, %v1088
        %v1090 = vlaneseq
        %v1091 = vshrl.u32 %v1090, 7
        %v1092 = vsub.s32 1, %v1091
        %v1093 = vrot.slane %v1084, %v1092
        %v1096 = vmul.f32 %v1081, %v1089
        %v1097 = vmul.f32 %v1082, %v1093
        %s1098 = scalar_lea.vmem %s2, 32
        %v1099 = vld [vmem:[%s1098] sm:$0xf]
        %v1101 = vsel %vm302, %v1099, 0
        %v1104 = vsel %vm306, %v1096, 0
        %v1107 = vsel %vm306, %v1097, 0
        %1109 = vmatprep.subr.mxu0 0.0
        %1110 = vmatpush1.msra.mxu0 0.0
        %1111 = vmatprep.subr.mxu0 0.0
        %1112 = vmatpush1.msra.mxu0 0.0
        %1113 = vmatprep.subr.mxu0 0.0
        %1114 = vmatpush1.msra.mxu0 0.0
        %1115 = vmatprep.subr.mxu0 0.0
        %1116 = vmatpush1.msra.mxu0 0.0
        %1117 = vmatprep.subr.mxu0 0.0
        %1118 = vmatpush1.msra.mxu0 0.0
        %1119 = vmatprep.subr.mxu0 0.0
        %1120 = vmatpush1.msra.mxu0 0.0
        %1121 = vmatprep.subr.mxu0 0.0
        %1122 = vmatpush1.msra.mxu0 0.0
        %1123 = vmatprep.subr.mxu0 0.0
        %1124 = vmatpush1.msra.mxu0 0.0
        %1125 = vmatprep.subr.mxu0 0.0
        %1126 = vmatpush1.msra.mxu0 0.0
        %1127 = vmatprep.subr.mxu0 0.0
        %1128 = vmatpush1.msra.mxu0 0.0
        %1129 = vmatprep.subr.mxu0 0.0
        %1130 = vmatpush1.msra.mxu0 0.0
        %1131 = vmatprep.subr.mxu0 0.0
        %1132 = vmatpush1.msra.mxu0 0.0
        %1133 = vmatprep.subr.mxu0 0.0
        %1134 = vmatpush1.msra.mxu0 0.0
        %1135 = vmatprep.subr.mxu0 0.0
        %1136 = vmatpush1.msra.mxu0 0.0
        %1137 = vmatprep.subr.mxu0 0.0
        %1138 = vmatpush1.msra.mxu0 0.0
        %1139 = vmatprep.subr.mxu0 %v1107
        %1140 = vmatpush1.msra.mxu0 %v1104
        %1141 = vmatprep.subr.mxu0 0.0
        %1142 = vmatpush2.msra.mxu0 0.0
        %1143 = vmatprep.subr.mxu0 0.0
        %1144 = vmatpush2.msra.mxu0 0.0
        %1145 = vmatprep.subr.mxu0 0.0
        %1146 = vmatpush2.msra.mxu0 0.0
        %1147 = vmatprep.subr.mxu0 0.0
        %1148 = vmatpush2.msra.mxu0 0.0
        %1149 = vmatprep.subr.mxu0 0.0
        %1150 = vmatpush2.msra.mxu0 0.0
        %1151 = vmatprep.subr.mxu0 0.0
        %1152 = vmatpush2.msra.mxu0 0.0
        %1153 = vmatprep.subr.mxu0 0.0
        %1154 = vmatpush2.msra.mxu0 0.0
        %1155 = vmatprep.subr.mxu0 0.0
        %1156 = vmatpush2.msra.mxu0 0.0
        %1157 = vmatprep.subr.mxu0 0.0
        %1158 = vmatpush2.msra.mxu0 0.0
        %1159 = vmatprep.subr.mxu0 0.0
        %1160 = vmatpush2.msra.mxu0 0.0
        %1161 = vmatprep.subr.mxu0 0.0
        %1162 = vmatpush2.msra.mxu0 0.0
        %1163 = vmatprep.subr.mxu0 0.0
        %1164 = vmatpush2.msra.mxu0 0.0
        %1165 = vmatprep.subr.mxu0 0.0
        %1166 = vmatpush2.msra.mxu0 0.0
        %1167 = vmatprep.subr.mxu0 0.0
        %1168 = vmatpush2.msra.mxu0 0.0
        %1169 = vmatprep.subr.mxu0 0.0
        %1170 = vmatpush2.msra.mxu0 0.0
        %1171 = vmatprep.subr.mxu0 0.0
        %1172 = vmatpush2.msra.mxu0 0.0
        %1173 = vmatprep.mubr.f32.mxu0 0.0
        %1174 = vmatmul.mubr.f32.gmra.mxu0 %v1101
        %v1175 = vpop.f32.mrf.mxu0
        %v1176 = vadd.f32 0.0, %v1175
        %v1177 = vpop.f32.mrf.mxu0
        %v1178 = vadd.f32 0.0, %v1177
        %1179 = vdwg.mxu0
        %v1180 = vadd.f32 %v1074, %v1176
        %v1181 = vadd.f32 %v1075, %v1178
        %v1182 = vld [vmem:[%s3] sm:$0xf]
        %1184 = vset.pattern.permute.xlu0 0
        %1185 = vperm.xlu0 %1184, %v1182
        %v1186 = vpop.permute.xlu0 %1185
        %v1188 = vadd.f32 %v1180, %v1186
        %v1189 = vadd.f32 %v1181, %v1186
        %v1190 = vmax.f32 %v1188, 0.0
        %v1191 = vmax.f32 %v1189, 0.0
        %1192 = vrot.lane.b32.xlu0 %v1190, 17
        %v1193 = vpop.permute.xlu0 %1192
        %1194 = vrot.lane.b32.xlu0 %v1191, 17
        %v1195 = vpop.permute.xlu0 %1194
        %v1196 = vsel %vm260, %v1193, %v1195
        %v1197 = vsel %vm260, %v1195, %v1193
        %v1198 = vmul.f32 %v1197, %v268
        %v1199 = vmul.f32 %v1196, %v272
        %v1200 = vld [vmem:[%s4] sm:$0xf]
        %1201 = vrot.lane.b32.xlu0 %v1190, 16
        %v1202 = vpop.permute.xlu0 %1201
        %1203 = vrot.lane.b32.xlu0 %v1191, 16
        %v1204 = vpop.permute.xlu0 %1203
        %v1205 = vsel %vm282, %v1202, %v1204
        %v1206 = vsel %vm282, %v1204, %v1202
        %v1207 = vmul.f32 %v1206, %v291
        %v1208 = vmul.f32 %v1205, %v295
        %s1209 = scalar_lea.vmem %s4, 4
        %v1210 = vld [vmem:[%s1209] sm:$0xf]
        %v1212 = vsel %vm302, %v1210, 0
        %v1215 = vsel %vm306, %v1207, 0
        %v1218 = vsel %vm306, %v1208, 0
        %1220 = vmatprep.subr.mxu0 0.0
        %1221 = vmatpush1.msra.mxu0 0.0
        %1222 = vmatprep.subr.mxu0 0.0
        %1223 = vmatpush1.msra.mxu0 0.0
        %1224 = vmatprep.subr.mxu0 0.0
        %1225 = vmatpush1.msra.mxu0 0.0
        %1226 = vmatprep.subr.mxu0 0.0
        %1227 = vmatpush1.msra.mxu0 0.0
        %1228 = vmatprep.subr.mxu0 0.0
        %1229 = vmatpush1.msra.mxu0 0.0
        %1230 = vmatprep.subr.mxu0 0.0
        %1231 = vmatpush1.msra.mxu0 0.0
        %1232 = vmatprep.subr.mxu0 0.0
        %1233 = vmatpush1.msra.mxu0 0.0
        %1234 = vmatprep.subr.mxu0 0.0
        %1235 = vmatpush1.msra.mxu0 0.0
        %1236 = vmatprep.subr.mxu0 0.0
        %1237 = vmatpush1.msra.mxu0 0.0
        %1238 = vmatprep.subr.mxu0 0.0
        %1239 = vmatpush1.msra.mxu0 0.0
        %1240 = vmatprep.subr.mxu0 0.0
        %1241 = vmatpush1.msra.mxu0 0.0
        %1242 = vmatprep.subr.mxu0 0.0
        %1243 = vmatpush1.msra.mxu0 0.0
        %1244 = vmatprep.subr.mxu0 0.0
        %1245 = vmatpush1.msra.mxu0 0.0
        %1246 = vmatprep.subr.mxu0 0.0
        %1247 = vmatpush1.msra.mxu0 0.0
        %1248 = vmatprep.subr.mxu0 0.0
        %1249 = vmatpush1.msra.mxu0 0.0
        %1250 = vmatprep.subr.mxu0 %v1218
        %1251 = vmatpush1.msra.mxu0 %v1215
        %1252 = vmatprep.subr.mxu0 0.0
        %1253 = vmatpush2.msra.mxu0 0.0
        %1254 = vmatprep.subr.mxu0 0.0
        %1255 = vmatpush2.msra.mxu0 0.0
        %1256 = vmatprep.subr.mxu0 0.0
        %1257 = vmatpush2.msra.mxu0 0.0
        %1258 = vmatprep.subr.mxu0 0.0
        %1259 = vmatpush2.msra.mxu0 0.0
        %1260 = vmatprep.subr.mxu0 0.0
        %1261 = vmatpush2.msra.mxu0 0.0
        %1262 = vmatprep.subr.mxu0 0.0
        %1263 = vmatpush2.msra.mxu0 0.0
        %1264 = vmatprep.subr.mxu0 0.0
        %1265 = vmatpush2.msra.mxu0 0.0
        %1266 = vmatprep.subr.mxu0 0.0
        %1267 = vmatpush2.msra.mxu0 0.0
        %1268 = vmatprep.subr.mxu0 0.0
        %1269 = vmatpush2.msra.mxu0 0.0
        %1270 = vmatprep.subr.mxu0 0.0
        %1271 = vmatpush2.msra.mxu0 0.0
        %1272 = vmatprep.subr.mxu0 0.0
        %1273 = vmatpush2.msra.mxu0 0.0
        %1274 = vmatprep.subr.mxu0 0.0
        %1275 = vmatpush2.msra.mxu0 0.0
        %1276 = vmatprep.subr.mxu0 0.0
        %1277 = vmatpush2.msra.mxu0 0.0
        %1278 = vmatprep.subr.mxu0 0.0
        %1279 = vmatpush2.msra.mxu0 0.0
        %1280 = vmatprep.subr.mxu0 0.0
        %1281 = vmatpush2.msra.mxu0 0.0
        %1282 = vmatprep.subr.mxu0 0.0
        %1283 = vmatpush2.msra.mxu0 0.0
        %1284 = vmatprep.mubr.f32.mxu0 0.0
        %1285 = vmatmul.mubr.f32.gmra.mxu0 %v1212
        %v1286 = vpop.f32.mrf.mxu0
        %v1287 = vadd.f32 0.0, %v1286
        %v1288 = vpop.f32.mrf.mxu0
        %v1289 = vadd.f32 0.0, %v1288
        %1290 = vdwg.mxu0
        %v1292 = vsel %vm302, %v1200, 0
        %v1295 = vsel %vm306, %v1198, 0
        %v1298 = vsel %vm306, %v1199, 0
        %1300 = vmatprep.subr.mxu0 0.0
        %1301 = vmatpush1.msra.mxu0 0.0
        %1302 = vmatprep.subr.mxu0 0.0
        %1303 = vmatpush1.msra.mxu0 0.0
        %1304 = vmatprep.subr.mxu0 0.0
        %1305 = vmatpush1.msra.mxu0 0.0
        %1306 = vmatprep.subr.mxu0 0.0
        %1307 = vmatpush1.msra.mxu0 0.0
        %1308 = vmatprep.subr.mxu0 0.0
        %1309 = vmatpush1.msra.mxu0 0.0
        %1310 = vmatprep.subr.mxu0 0.0
        %1311 = vmatpush1.msra.mxu0 0.0
        %1312 = vmatprep.subr.mxu0 0.0
        %1313 = vmatpush1.msra.mxu0 0.0
        %1314 = vmatprep.subr.mxu0 0.0
        %1315 = vmatpush1.msra.mxu0 0.0
        %1316 = vmatprep.subr.mxu0 0.0
        %1317 = vmatpush1.msra.mxu0 0.0
        %1318 = vmatprep.subr.mxu0 0.0
        %1319 = vmatpush1.msra.mxu0 0.0
        %1320 = vmatprep.subr.mxu0 0.0
        %1321 = vmatpush1.msra.mxu0 0.0
        %1322 = vmatprep.subr.mxu0 0.0
        %1323 = vmatpush1.msra.mxu0 0.0
        %1324 = vmatprep.subr.mxu0 0.0
        %1325 = vmatpush1.msra.mxu0 0.0
        %1326 = vmatprep.subr.mxu0 0.0
        %1327 = vmatpush1.msra.mxu0 0.0
        %1328 = vmatprep.subr.mxu0 0.0
        %1329 = vmatpush1.msra.mxu0 0.0
        %1330 = vmatprep.subr.mxu0 %v1298
        %1331 = vmatpush1.msra.mxu0 %v1295
        %1332 = vmatprep.subr.mxu0 0.0
        %1333 = vmatpush2.msra.mxu0 0.0
        %1334 = vmatprep.subr.mxu0 0.0
        %1335 = vmatpush2.msra.mxu0 0.0
        %1336 = vmatprep.subr.mxu0 0.0
        %1337 = vmatpush2.msra.mxu0 0.0
        %1338 = vmatprep.subr.mxu0 0.0
        %1339 = vmatpush2.msra.mxu0 0.0
        %1340 = vmatprep.subr.mxu0 0.0
        %1341 = vmatpush2.msra.mxu0 0.0
        %1342 = vmatprep.subr.mxu0 0.0
        %1343 = vmatpush2.msra.mxu0 0.0
        %1344 = vmatprep.subr.mxu0 0.0
        %1345 = vmatpush2.msra.mxu0 0.0
        %1346 = vmatprep.subr.mxu0 0.0
        %1347 = vmatpush2.msra.mxu0 0.0
        %1348 = vmatprep.subr.mxu0 0.0
        %1349 = vmatpush2.msra.mxu0 0.0
        %1350 = vmatprep.subr.mxu0 0.0
        %1351 = vmatpush2.msra.mxu0 0.0
        %1352 = vmatprep.subr.mxu0 0.0
        %1353 = vmatpush2.msra.mxu0 0.0
        %1354 = vmatprep.subr.mxu0 0.0
        %1355 = vmatpush2.msra.mxu0 0.0
        %1356 = vmatprep.subr.mxu0 0.0
        %1357 = vmatpush2.msra.mxu0 0.0
        %1358 = vmatprep.subr.mxu0 0.0
        %1359 = vmatpush2.msra.mxu0 0.0
        %1360 = vmatprep.subr.mxu0 0.0
        %1361 = vmatpush2.msra.mxu0 0.0
        %1362 = vmatprep.subr.mxu0 0.0
        %1363 = vmatpush2.msra.mxu0 0.0
        %1364 = vmatprep.mubr.f32.mxu0 0.0
        %1365 = vmatmul.mubr.f32.gmra.mxu0 %v1292
        %v1366 = vpop.f32.mrf.mxu0
        %v1367 = vadd.f32 %v1287, %v1366
        %v1368 = vpop.f32.mrf.mxu0
        %v1369 = vadd.f32 %v1289, %v1368
        %1370 = vdwg.mxu0
        %1371 = vrot.lane.b32.xlu0 %v1190, 15
        %v1372 = vpop.permute.xlu0 %1371
        %1373 = vrot.lane.b32.xlu0 %v1191, 15
        %v1374 = vpop.permute.xlu0 %1373
        %v1375 = vsel %vm468, %v1372, %v1374
        %v1376 = vsel %vm468, %v1374, %v1372
        %v1377 = vmul.f32 %v1376, %v477
        %v1378 = vmul.f32 %v1375, %v481
        %s1379 = scalar_lea.vmem %s4, 8
        %v1380 = vld [vmem:[%s1379] sm:$0xf]
        %v1382 = vsel %vm302, %v1380, 0
        %v1385 = vsel %vm306, %v1377, 0
        %v1388 = vsel %vm306, %v1378, 0
        %1390 = vmatprep.subr.mxu0 0.0
        %1391 = vmatpush1.msra.mxu0 0.0
        %1392 = vmatprep.subr.mxu0 0.0
        %1393 = vmatpush1.msra.mxu0 0.0
        %1394 = vmatprep.subr.mxu0 0.0
        %1395 = vmatpush1.msra.mxu0 0.0
        %1396 = vmatprep.subr.mxu0 0.0
        %1397 = vmatpush1.msra.mxu0 0.0
        %1398 = vmatprep.subr.mxu0 0.0
        %1399 = vmatpush1.msra.mxu0 0.0
        %1400 = vmatprep.subr.mxu0 0.0
        %1401 = vmatpush1.msra.mxu0 0.0
        %1402 = vmatprep.subr.mxu0 0.0
        %1403 = vmatpush1.msra.mxu0 0.0
        %1404 = vmatprep.subr.mxu0 0.0
        %1405 = vmatpush1.msra.mxu0 0.0
        %1406 = vmatprep.subr.mxu0 0.0
        %1407 = vmatpush1.msra.mxu0 0.0
        %1408 = vmatprep.subr.mxu0 0.0
        %1409 = vmatpush1.msra.mxu0 0.0
        %1410 = vmatprep.subr.mxu0 0.0
        %1411 = vmatpush1.msra.mxu0 0.0
        %1412 = vmatprep.subr.mxu0 0.0
        %1413 = vmatpush1.msra.mxu0 0.0
        %1414 = vmatprep.subr.mxu0 0.0
        %1415 = vmatpush1.msra.mxu0 0.0
        %1416 = vmatprep.subr.mxu0 0.0
        %1417 = vmatpush1.msra.mxu0 0.0
        %1418 = vmatprep.subr.mxu0 0.0
        %1419 = vmatpush1.msra.mxu0 0.0
        %1420 = vmatprep.subr.mxu0 %v1388
        %1421 = vmatpush1.msra.mxu0 %v1385
        %1422 = vmatprep.subr.mxu0 0.0
        %1423 = vmatpush2.msra.mxu0 0.0
        %1424 = vmatprep.subr.mxu0 0.0
        %1425 = vmatpush2.msra.mxu0 0.0
        %1426 = vmatprep.subr.mxu0 0.0
        %1427 = vmatpush2.msra.mxu0 0.0
        %1428 = vmatprep.subr.mxu0 0.0
        %1429 = vmatpush2.msra.mxu0 0.0
        %1430 = vmatprep.subr.mxu0 0.0
        %1431 = vmatpush2.msra.mxu0 0.0
        %1432 = vmatprep.subr.mxu0 0.0
        %1433 = vmatpush2.msra.mxu0 0.0
        %1434 = vmatprep.subr.mxu0 0.0
        %1435 = vmatpush2.msra.mxu0 0.0
        %1436 = vmatprep.subr.mxu0 0.0
        %1437 = vmatpush2.msra.mxu0 0.0
        %1438 = vmatprep.subr.mxu0 0.0
        %1439 = vmatpush2.msra.mxu0 0.0
        %1440 = vmatprep.subr.mxu0 0.0
        %1441 = vmatpush2.msra.mxu0 0.0
        %1442 = vmatprep.subr.mxu0 0.0
        %1443 = vmatpush2.msra.mxu0 0.0
        %1444 = vmatprep.subr.mxu0 0.0
        %1445 = vmatpush2.msra.mxu0 0.0
        %1446 = vmatprep.subr.mxu0 0.0
        %1447 = vmatpush2.msra.mxu0 0.0
        %1448 = vmatprep.subr.mxu0 0.0
        %1449 = vmatpush2.msra.mxu0 0.0
        %1450 = vmatprep.subr.mxu0 0.0
        %1451 = vmatpush2.msra.mxu0 0.0
        %1452 = vmatprep.subr.mxu0 0.0
        %1453 = vmatpush2.msra.mxu0 0.0
        %1454 = vmatprep.mubr.f32.mxu0 0.0
        %1455 = vmatmul.mubr.f32.gmra.mxu0 %v1382
        %v1456 = vpop.f32.mrf.mxu0
        %v1457 = vadd.f32 0.0, %v1456
        %v1458 = vpop.f32.mrf.mxu0
        %v1459 = vadd.f32 0.0, %v1458
        %1460 = vdwg.mxu0
        %v1461 = vadd.f32 %v1367, %v1457
        %v1462 = vadd.f32 %v1369, %v1459
        %1463 = vrot.lane.b32.xlu0 %v1190, 1
        %v1464 = vpop.permute.xlu0 %1463
        %1465 = vrot.lane.b32.xlu0 %v1191, 1
        %v1466 = vpop.permute.xlu0 %1465
        %v1467 = vsel %vm574, %v1464, %v1466
        %v1468 = vsel %vm574, %v1466, %v1464
        %v1469 = vmul.f32 %v1468, %v583
        %v1470 = vmul.f32 %v1467, %v587
        %s1471 = scalar_lea.vmem %s4, 12
        %v1472 = vld [vmem:[%s1471] sm:$0xf]
        %v1474 = vsel %vm302, %v1472, 0
        %v1477 = vsel %vm306, %v1469, 0
        %v1480 = vsel %vm306, %v1470, 0
        %1482 = vmatprep.subr.mxu0 0.0
        %1483 = vmatpush1.msra.mxu0 0.0
        %1484 = vmatprep.subr.mxu0 0.0
        %1485 = vmatpush1.msra.mxu0 0.0
        %1486 = vmatprep.subr.mxu0 0.0
        %1487 = vmatpush1.msra.mxu0 0.0
        %1488 = vmatprep.subr.mxu0 0.0
        %1489 = vmatpush1.msra.mxu0 0.0
        %1490 = vmatprep.subr.mxu0 0.0
        %1491 = vmatpush1.msra.mxu0 0.0
        %1492 = vmatprep.subr.mxu0 0.0
        %1493 = vmatpush1.msra.mxu0 0.0
        %1494 = vmatprep.subr.mxu0 0.0
        %1495 = vmatpush1.msra.mxu0 0.0
        %1496 = vmatprep.subr.mxu0 0.0
        %1497 = vmatpush1.msra.mxu0 0.0
        %1498 = vmatprep.subr.mxu0 0.0
        %1499 = vmatpush1.msra.mxu0 0.0
        %1500 = vmatprep.subr.mxu0 0.0
        %1501 = vmatpush1.msra.mxu0 0.0
        %1502 = vmatprep.subr.mxu0 0.0
        %1503 = vmatpush1.msra.mxu0 0.0
        %1504 = vmatprep.subr.mxu0 0.0
        %1505 = vmatpush1.msra.mxu0 0.0
        %1506 = vmatprep.subr.mxu0 0.0
        %1507 = vmatpush1.msra.mxu0 0.0
        %1508 = vmatprep.subr.mxu0 0.0
        %1509 = vmatpush1.msra.mxu0 0.0
        %1510 = vmatprep.subr.mxu0 0.0
        %1511 = vmatpush1.msra.mxu0 0.0
        %1512 = vmatprep.subr.mxu0 %v1480
        %1513 = vmatpush1.msra.mxu0 %v1477
        %1514 = vmatprep.subr.mxu0 0.0
        %1515 = vmatpush2.msra.mxu0 0.0
        %1516 = vmatprep.subr.mxu0 0.0
        %1517 = vmatpush2.msra.mxu0 0.0
        %1518 = vmatprep.subr.mxu0 0.0
        %1519 = vmatpush2.msra.mxu0 0.0
        %1520 = vmatprep.subr.mxu0 0.0
        %1521 = vmatpush2.msra.mxu0 0.0
        %1522 = vmatprep.subr.mxu0 0.0
        %1523 = vmatpush2.msra.mxu0 0.0
        %1524 = vmatprep.subr.mxu0 0.0
        %1525 = vmatpush2.msra.mxu0 0.0
        %1526 = vmatprep.subr.mxu0 0.0
        %1527 = vmatpush2.msra.mxu0 0.0
        %1528 = vmatprep.subr.mxu0 0.0
        %1529 = vmatpush2.msra.mxu0 0.0
        %1530 = vmatprep.subr.mxu0 0.0
        %1531 = vmatpush2.msra.mxu0 0.0
        %1532 = vmatprep.subr.mxu0 0.0
        %1533 = vmatpush2.msra.mxu0 0.0
        %1534 = vmatprep.subr.mxu0 0.0
        %1535 = vmatpush2.msra.mxu0 0.0
        %1536 = vmatprep.subr.mxu0 0.0
        %1537 = vmatpush2.msra.mxu0 0.0
        %1538 = vmatprep.subr.mxu0 0.0
        %1539 = vmatpush2.msra.mxu0 0.0
        %1540 = vmatprep.subr.mxu0 0.0
        %1541 = vmatpush2.msra.mxu0 0.0
        %1542 = vmatprep.subr.mxu0 0.0
        %1543 = vmatpush2.msra.mxu0 0.0
        %1544 = vmatprep.subr.mxu0 0.0
        %1545 = vmatpush2.msra.mxu0 0.0
        %1546 = vmatprep.mubr.f32.mxu0 0.0
        %1547 = vmatmul.mubr.f32.gmra.mxu0 %v1474
        %v1548 = vpop.f32.mrf.mxu0
        %v1549 = vadd.f32 0.0, %v1548
        %v1550 = vpop.f32.mrf.mxu0
        %v1551 = vadd.f32 0.0, %v1550
        %1552 = vdwg.mxu0
        %v1553 = vadd.f32 %v1461, %v1549
        %v1554 = vadd.f32 %v1462, %v1551
        %s1555 = scalar_lea.vmem %s4, 16
        %v1556 = vld [vmem:[%s1555] sm:$0xf]
        %v1558 = vsel %vm302, %v1556, 0
        %v1561 = vsel %vm306, %v1190, 0
        %v1564 = vsel %vm306, %v1191, 0
        %1566 = vmatprep.subr.mxu0 0.0
        %1567 = vmatpush1.msra.mxu0 0.0
        %1568 = vmatprep.subr.mxu0 0.0
        %1569 = vmatpush1.msra.mxu0 0.0
        %1570 = vmatprep.subr.mxu0 0.0
        %1571 = vmatpush1.msra.mxu0 0.0
        %1572 = vmatprep.subr.mxu0 0.0
        %1573 = vmatpush1.msra.mxu0 0.0
        %1574 = vmatprep.subr.mxu0 0.0
        %1575 = vmatpush1.msra.mxu0 0.0
        %1576 = vmatprep.subr.mxu0 0.0
        %1577 = vmatpush1.msra.mxu0 0.0
        %1578 = vmatprep.subr.mxu0 0.0
        %1579 = vmatpush1.msra.mxu0 0.0
        %1580 = vmatprep.subr.mxu0 0.0
        %1581 = vmatpush1.msra.mxu0 0.0
        %1582 = vmatprep.subr.mxu0 0.0
        %1583 = vmatpush1.msra.mxu0 0.0
        %1584 = vmatprep.subr.mxu0 0.0
        %1585 = vmatpush1.msra.mxu0 0.0
        %1586 = vmatprep.subr.mxu0 0.0
        %1587 = vmatpush1.msra.mxu0 0.0
        %1588 = vmatprep.subr.mxu0 0.0
        %1589 = vmatpush1.msra.mxu0 0.0
        %1590 = vmatprep.subr.mxu0 0.0
        %1591 = vmatpush1.msra.mxu0 0.0
        %1592 = vmatprep.subr.mxu0 0.0
        %1593 = vmatpush1.msra.mxu0 0.0
        %1594 = vmatprep.subr.mxu0 0.0
        %1595 = vmatpush1.msra.mxu0 0.0
        %1596 = vmatprep.subr.mxu0 %v1564
        %1597 = vmatpush1.msra.mxu0 %v1561
        %1598 = vmatprep.subr.mxu0 0.0
        %1599 = vmatpush2.msra.mxu0 0.0
        %1600 = vmatprep.subr.mxu0 0.0
        %1601 = vmatpush2.msra.mxu0 0.0
        %1602 = vmatprep.subr.mxu0 0.0
        %1603 = vmatpush2.msra.mxu0 0.0
        %1604 = vmatprep.subr.mxu0 0.0
        %1605 = vmatpush2.msra.mxu0 0.0
        %1606 = vmatprep.subr.mxu0 0.0
        %1607 = vmatpush2.msra.mxu0 0.0
        %1608 = vmatprep.subr.mxu0 0.0
        %1609 = vmatpush2.msra.mxu0 0.0
        %1610 = vmatprep.subr.mxu0 0.0
        %1611 = vmatpush2.msra.mxu0 0.0
        %1612 = vmatprep.subr.mxu0 0.0
        %1613 = vmatpush2.msra.mxu0 0.0
        %1614 = vmatprep.subr.mxu0 0.0
        %1615 = vmatpush2.msra.mxu0 0.0
        %1616 = vmatprep.subr.mxu0 0.0
        %1617 = vmatpush2.msra.mxu0 0.0
        %1618 = vmatprep.subr.mxu0 0.0
        %1619 = vmatpush2.msra.mxu0 0.0
        %1620 = vmatprep.subr.mxu0 0.0
        %1621 = vmatpush2.msra.mxu0 0.0
        %1622 = vmatprep.subr.mxu0 0.0
        %1623 = vmatpush2.msra.mxu0 0.0
        %1624 = vmatprep.subr.mxu0 0.0
        %1625 = vmatpush2.msra.mxu0 0.0
        %1626 = vmatprep.subr.mxu0 0.0
        %1627 = vmatpush2.msra.mxu0 0.0
        %1628 = vmatprep.subr.mxu0 0.0
        %1629 = vmatpush2.msra.mxu0 0.0
        %1630 = vmatprep.mubr.f32.mxu0 0.0
        %1631 = vmatmul.mubr.f32.gmra.mxu0 %v1558
        %v1632 = vpop.f32.mrf.mxu0
        %v1633 = vadd.f32 0.0, %v1632
        %v1634 = vpop.f32.mrf.mxu0
        %v1635 = vadd.f32 0.0, %v1634
        %1636 = vdwg.mxu0
        %v1637 = vadd.f32 %v1553, %v1633
        %v1638 = vadd.f32 %v1554, %v1635
        %1639 = vrot.lane.b32.xlu0 %v1190, 127
        %v1640 = vpop.permute.xlu0 %1639
        %1641 = vrot.lane.b32.xlu0 %v1191, 127
        %v1642 = vpop.permute.xlu0 %1641
        %v1643 = vsel %vm762, %v1640, %v1642
        %v1644 = vsel %vm762, %v1642, %v1640
        %v1645 = vmul.f32 %v1643, %v771
        %v1646 = vmul.f32 %v1644, %v775
        %s1647 = scalar_lea.vmem %s4, 20
        %v1648 = vld [vmem:[%s1647] sm:$0xf]
        %v1650 = vsel %vm302, %v1648, 0
        %v1653 = vsel %vm306, %v1645, 0
        %v1656 = vsel %vm306, %v1646, 0
        %1658 = vmatprep.subr.mxu0 0.0
        %1659 = vmatpush1.msra.mxu0 0.0
        %1660 = vmatprep.subr.mxu0 0.0
        %1661 = vmatpush1.msra.mxu0 0.0
        %1662 = vmatprep.subr.mxu0 0.0
        %1663 = vmatpush1.msra.mxu0 0.0
        %1664 = vmatprep.subr.mxu0 0.0
        %1665 = vmatpush1.msra.mxu0 0.0
        %1666 = vmatprep.subr.mxu0 0.0
        %1667 = vmatpush1.msra.mxu0 0.0
        %1668 = vmatprep.subr.mxu0 0.0
        %1669 = vmatpush1.msra.mxu0 0.0
        %1670 = vmatprep.subr.mxu0 0.0
        %1671 = vmatpush1.msra.mxu0 0.0
        %1672 = vmatprep.subr.mxu0 0.0
        %1673 = vmatpush1.msra.mxu0 0.0
        %1674 = vmatprep.subr.mxu0 0.0
        %1675 = vmatpush1.msra.mxu0 0.0
        %1676 = vmatprep.subr.mxu0 0.0
        %1677 = vmatpush1.msra.mxu0 0.0
        %1678 = vmatprep.subr.mxu0 0.0
        %1679 = vmatpush1.msra.mxu0 0.0
        %1680 = vmatprep.subr.mxu0 0.0
        %1681 = vmatpush1.msra.mxu0 0.0
        %1682 = vmatprep.subr.mxu0 0.0
        %1683 = vmatpush1.msra.mxu0 0.0
        %1684 = vmatprep.subr.mxu0 0.0
        %1685 = vmatpush1.msra.mxu0 0.0
        %1686 = vmatprep.subr.mxu0 0.0
        %1687 = vmatpush1.msra.mxu0 0.0
        %1688 = vmatprep.subr.mxu0 %v1656
        %1689 = vmatpush1.msra.mxu0 %v1653
        %1690 = vmatprep.subr.mxu0 0.0
        %1691 = vmatpush2.msra.mxu0 0.0
        %1692 = vmatprep.subr.mxu0 0.0
        %1693 = vmatpush2.msra.mxu0 0.0
        %1694 = vmatprep.subr.mxu0 0.0
        %1695 = vmatpush2.msra.mxu0 0.0
        %1696 = vmatprep.subr.mxu0 0.0
        %1697 = vmatpush2.msra.mxu0 0.0
        %1698 = vmatprep.subr.mxu0 0.0
        %1699 = vmatpush2.msra.mxu0 0.0
        %1700 = vmatprep.subr.mxu0 0.0
        %1701 = vmatpush2.msra.mxu0 0.0
        %1702 = vmatprep.subr.mxu0 0.0
        %1703 = vmatpush2.msra.mxu0 0.0
        %1704 = vmatprep.subr.mxu0 0.0
        %1705 = vmatpush2.msra.mxu0 0.0
        %1706 = vmatprep.subr.mxu0 0.0
        %1707 = vmatpush2.msra.mxu0 0.0
        %1708 = vmatprep.subr.mxu0 0.0
        %1709 = vmatpush2.msra.mxu0 0.0
        %1710 = vmatprep.subr.mxu0 0.0
        %1711 = vmatpush2.msra.mxu0 0.0
        %1712 = vmatprep.subr.mxu0 0.0
        %1713 = vmatpush2.msra.mxu0 0.0
        %1714 = vmatprep.subr.mxu0 0.0
        %1715 = vmatpush2.msra.mxu0 0.0
        %1716 = vmatprep.subr.mxu0 0.0
        %1717 = vmatpush2.msra.mxu0 0.0
        %1718 = vmatprep.subr.mxu0 0.0
        %1719 = vmatpush2.msra.mxu0 0.0
        %1720 = vmatprep.subr.mxu0 0.0
        %1721 = vmatpush2.msra.mxu0 0.0
        %1722 = vmatprep.mubr.f32.mxu0 0.0
        %1723 = vmatmul.mubr.f32.gmra.mxu0 %v1650
        %v1724 = vpop.f32.mrf.mxu0
        %v1725 = vadd.f32 0.0, %v1724
        %v1726 = vpop.f32.mrf.mxu0
        %v1727 = vadd.f32 0.0, %v1726
        %1728 = vdwg.mxu0
        %v1729 = vadd.f32 %v1637, %v1725
        %v1730 = vadd.f32 %v1638, %v1727
        %1731 = vrot.lane.b32.xlu0 %v1190, 113
        %v1732 = vpop.permute.xlu0 %1731
        %1733 = vrot.lane.b32.xlu0 %v1191, 113
        %v1734 = vpop.permute.xlu0 %1733
        %v1735 = vsel %vm868, %v1732, %v1734
        %v1736 = vsel %vm868, %v1734, %v1732
        %v1737 = vmul.f32 %v1735, %v877
        %v1738 = vmul.f32 %v1736, %v881
        %s1739 = scalar_lea.vmem %s4, 24
        %v1740 = vld [vmem:[%s1739] sm:$0xf]
        %v1742 = vsel %vm302, %v1740, 0
        %v1745 = vsel %vm306, %v1737, 0
        %v1748 = vsel %vm306, %v1738, 0
        %1750 = vmatprep.subr.mxu0 0.0
        %1751 = vmatpush1.msra.mxu0 0.0
        %1752 = vmatprep.subr.mxu0 0.0
        %1753 = vmatpush1.msra.mxu0 0.0
        %1754 = vmatprep.subr.mxu0 0.0
        %1755 = vmatpush1.msra.mxu0 0.0
        %1756 = vmatprep.subr.mxu0 0.0
        %1757 = vmatpush1.msra.mxu0 0.0
        %1758 = vmatprep.subr.mxu0 0.0
        %1759 = vmatpush1.msra.mxu0 0.0
        %1760 = vmatprep.subr.mxu0 0.0
        %1761 = vmatpush1.msra.mxu0 0.0
        %1762 = vmatprep.subr.mxu0 0.0
        %1763 = vmatpush1.msra.mxu0 0.0
        %1764 = vmatprep.subr.mxu0 0.0
        %1765 = vmatpush1.msra.mxu0 0.0
        %1766 = vmatprep.subr.mxu0 0.0
        %1767 = vmatpush1.msra.mxu0 0.0
        %1768 = vmatprep.subr.mxu0 0.0
        %1769 = vmatpush1.msra.mxu0 0.0
        %1770 = vmatprep.subr.mxu0 0.0
        %1771 = vmatpush1.msra.mxu0 0.0
        %1772 = vmatprep.subr.mxu0 0.0
        %1773 = vmatpush1.msra.mxu0 0.0
        %1774 = vmatprep.subr.mxu0 0.0
        %1775 = vmatpush1.msra.mxu0 0.0
        %1776 = vmatprep.subr.mxu0 0.0
        %1777 = vmatpush1.msra.mxu0 0.0
        %1778 = vmatprep.subr.mxu0 0.0
        %1779 = vmatpush1.msra.mxu0 0.0
        %1780 = vmatprep.subr.mxu0 %v1748
        %1781 = vmatpush1.msra.mxu0 %v1745
        %1782 = vmatprep.subr.mxu0 0.0
        %1783 = vmatpush2.msra.mxu0 0.0
        %1784 = vmatprep.subr.mxu0 0.0
        %1785 = vmatpush2.msra.mxu0 0.0
        %1786 = vmatprep.subr.mxu0 0.0
        %1787 = vmatpush2.msra.mxu0 0.0
        %1788 = vmatprep.subr.mxu0 0.0
        %1789 = vmatpush2.msra.mxu0 0.0
        %1790 = vmatprep.subr.mxu0 0.0
        %1791 = vmatpush2.msra.mxu0 0.0
        %1792 = vmatprep.subr.mxu0 0.0
        %1793 = vmatpush2.msra.mxu0 0.0
        %1794 = vmatprep.subr.mxu0 0.0
        %1795 = vmatpush2.msra.mxu0 0.0
        %1796 = vmatprep.subr.mxu0 0.0
        %1797 = vmatpush2.msra.mxu0 0.0
        %1798 = vmatprep.subr.mxu0 0.0
        %1799 = vmatpush2.msra.mxu0 0.0
        %1800 = vmatprep.subr.mxu0 0.0
        %1801 = vmatpush2.msra.mxu0 0.0
        %1802 = vmatprep.subr.mxu0 0.0
        %1803 = vmatpush2.msra.mxu0 0.0
        %1804 = vmatprep.subr.mxu0 0.0
        %1805 = vmatpush2.msra.mxu0 0.0
        %1806 = vmatprep.subr.mxu0 0.0
        %1807 = vmatpush2.msra.mxu0 0.0
        %1808 = vmatprep.subr.mxu0 0.0
        %1809 = vmatpush2.msra.mxu0 0.0
        %1810 = vmatprep.subr.mxu0 0.0
        %1811 = vmatpush2.msra.mxu0 0.0
        %1812 = vmatprep.subr.mxu0 0.0
        %1813 = vmatpush2.msra.mxu0 0.0
        %1814 = vmatprep.mubr.f32.mxu0 0.0
        %1815 = vmatmul.mubr.f32.gmra.mxu0 %v1742
        %v1816 = vpop.f32.mrf.mxu0
        %v1817 = vadd.f32 0.0, %v1816
        %v1818 = vpop.f32.mrf.mxu0
        %v1819 = vadd.f32 0.0, %v1818
        %1820 = vdwg.mxu0
        %v1821 = vadd.f32 %v1729, %v1817
        %v1822 = vadd.f32 %v1730, %v1819
        %1823 = vrot.lane.b32.xlu0 %v1190, 112
        %v1824 = vpop.permute.xlu0 %1823
        %1825 = vrot.lane.b32.xlu0 %v1191, 112
        %v1826 = vpop.permute.xlu0 %1825
        %v1827 = vsel %vm974, %v1824, %v1826
        %v1828 = vsel %vm974, %v1826, %v1824
        %v1829 = vmul.f32 %v1827, %v983
        %v1830 = vmul.f32 %v1828, %v987
        %s1831 = scalar_lea.vmem %s4, 28
        %v1832 = vld [vmem:[%s1831] sm:$0xf]
        %v1834 = vsel %vm302, %v1832, 0
        %v1837 = vsel %vm306, %v1829, 0
        %v1840 = vsel %vm306, %v1830, 0
        %1842 = vmatprep.subr.mxu0 0.0
        %1843 = vmatpush1.msra.mxu0 0.0
        %1844 = vmatprep.subr.mxu0 0.0
        %1845 = vmatpush1.msra.mxu0 0.0
        %1846 = vmatprep.subr.mxu0 0.0
        %1847 = vmatpush1.msra.mxu0 0.0
        %1848 = vmatprep.subr.mxu0 0.0
        %1849 = vmatpush1.msra.mxu0 0.0
        %1850 = vmatprep.subr.mxu0 0.0
        %1851 = vmatpush1.msra.mxu0 0.0
        %1852 = vmatprep.subr.mxu0 0.0
        %1853 = vmatpush1.msra.mxu0 0.0
        %1854 = vmatprep.subr.mxu0 0.0
        %1855 = vmatpush1.msra.mxu0 0.0
        %1856 = vmatprep.subr.mxu0 0.0
        %1857 = vmatpush1.msra.mxu0 0.0
        %1858 = vmatprep.subr.mxu0 0.0
        %1859 = vmatpush1.msra.mxu0 0.0
        %1860 = vmatprep.subr.mxu0 0.0
        %1861 = vmatpush1.msra.mxu0 0.0
        %1862 = vmatprep.subr.mxu0 0.0
        %1863 = vmatpush1.msra.mxu0 0.0
        %1864 = vmatprep.subr.mxu0 0.0
        %1865 = vmatpush1.msra.mxu0 0.0
        %1866 = vmatprep.subr.mxu0 0.0
        %1867 = vmatpush1.msra.mxu0 0.0
        %1868 = vmatprep.subr.mxu0 0.0
        %1869 = vmatpush1.msra.mxu0 0.0
        %1870 = vmatprep.subr.mxu0 0.0
        %1871 = vmatpush1.msra.mxu0 0.0
        %1872 = vmatprep.subr.mxu0 %v1840
        %1873 = vmatpush1.msra.mxu0 %v1837
        %1874 = vmatprep.subr.mxu0 0.0
        %1875 = vmatpush2.msra.mxu0 0.0
        %1876 = vmatprep.subr.mxu0 0.0
        %1877 = vmatpush2.msra.mxu0 0.0
        %1878 = vmatprep.subr.mxu0 0.0
        %1879 = vmatpush2.msra.mxu0 0.0
        %1880 = vmatprep.subr.mxu0 0.0
        %1881 = vmatpush2.msra.mxu0 0.0
        %1882 = vmatprep.subr.mxu0 0.0
        %1883 = vmatpush2.msra.mxu0 0.0
        %1884 = vmatprep.subr.mxu0 0.0
        %1885 = vmatpush2.msra.mxu0 0.0
        %1886 = vmatprep.subr.mxu0 0.0
        %1887 = vmatpush2.msra.mxu0 0.0
        %1888 = vmatprep.subr.mxu0 0.0
        %1889 = vmatpush2.msra.mxu0 0.0
        %1890 = vmatprep.subr.mxu0 0.0
        %1891 = vmatpush2.msra.mxu0 0.0
        %1892 = vmatprep.subr.mxu0 0.0
        %1893 = vmatpush2.msra.mxu0 0.0
        %1894 = vmatprep.subr.mxu0 0.0
        %1895 = vmatpush2.msra.mxu0 0.0
        %1896 = vmatprep.subr.mxu0 0.0
        %1897 = vmatpush2.msra.mxu0 0.0
        %1898 = vmatprep.subr.mxu0 0.0
        %1899 = vmatpush2.msra.mxu0 0.0
        %1900 = vmatprep.subr.mxu0 0.0
        %1901 = vmatpush2.msra.mxu0 0.0
        %1902 = vmatprep.subr.mxu0 0.0
        %1903 = vmatpush2.msra.mxu0 0.0
        %1904 = vmatprep.subr.mxu0 0.0
        %1905 = vmatpush2.msra.mxu0 0.0
        %1906 = vmatprep.mubr.f32.mxu0 0.0
        %1907 = vmatmul.mubr.f32.gmra.mxu0 %v1834
        %v1908 = vpop.f32.mrf.mxu0
        %v1909 = vadd.f32 0.0, %v1908
        %v1910 = vpop.f32.mrf.mxu0
        %v1911 = vadd.f32 0.0, %v1910
        %1912 = vdwg.mxu0
        %v1913 = vadd.f32 %v1821, %v1909
        %v1914 = vadd.f32 %v1822, %v1911
        %1915 = vrot.lane.b32.xlu0 %v1190, 111
        %v1916 = vpop.permute.xlu0 %1915
        %1917 = vrot.lane.b32.xlu0 %v1191, 111
        %v1918 = vpop.permute.xlu0 %1917
        %v1919 = vsel %vm1080, %v1916, %v1918
        %v1920 = vsel %vm1080, %v1918, %v1916
        %v1921 = vmul.f32 %v1919, %v1089
        %v1922 = vmul.f32 %v1920, %v1093
        %s1923 = scalar_lea.vmem %s4, 32
        %v1924 = vld [vmem:[%s1923] sm:$0xf]
        %v1926 = vsel %vm302, %v1924, 0
        %v1929 = vsel %vm306, %v1921, 0
        %v1932 = vsel %vm306, %v1922, 0
        %1934 = vmatprep.subr.mxu0 0.0
        %1935 = vmatpush1.msra.mxu0 0.0
        %1936 = vmatprep.subr.mxu0 0.0
        %1937 = vmatpush1.msra.mxu0 0.0
        %1938 = vmatprep.subr.mxu0 0.0
        %1939 = vmatpush1.msra.mxu0 0.0
        %1940 = vmatprep.subr.mxu0 0.0
        %1941 = vmatpush1.msra.mxu0 0.0
        %1942 = vmatprep.subr.mxu0 0.0
        %1943 = vmatpush1.msra.mxu0 0.0
        %1944 = vmatprep.subr.mxu0 0.0
        %1945 = vmatpush1.msra.mxu0 0.0
        %1946 = vmatprep.subr.mxu0 0.0
        %1947 = vmatpush1.msra.mxu0 0.0
        %1948 = vmatprep.subr.mxu0 0.0
        %1949 = vmatpush1.msra.mxu0 0.0
        %1950 = vmatprep.subr.mxu0 0.0
        %1951 = vmatpush1.msra.mxu0 0.0
        %1952 = vmatprep.subr.mxu0 0.0
        %1953 = vmatpush1.msra.mxu0 0.0
        %1954 = vmatprep.subr.mxu0 0.0
        %1955 = vmatpush1.msra.mxu0 0.0
        %1956 = vmatprep.subr.mxu0 0.0
        %1957 = vmatpush1.msra.mxu0 0.0
        %1958 = vmatprep.subr.mxu0 0.0
        %1959 = vmatpush1.msra.mxu0 0.0
        %1960 = vmatprep.subr.mxu0 0.0
        %1961 = vmatpush1.msra.mxu0 0.0
        %1962 = vmatprep.subr.mxu0 0.0
        %1963 = vmatpush1.msra.mxu0 0.0
        %1964 = vmatprep.subr.mxu0 %v1932
        %1965 = vmatpush1.msra.mxu0 %v1929
        %1966 = vmatprep.subr.mxu0 0.0
        %1967 = vmatpush2.msra.mxu0 0.0
        %1968 = vmatprep.subr.mxu0 0.0
        %1969 = vmatpush2.msra.mxu0 0.0
        %1970 = vmatprep.subr.mxu0 0.0
        %1971 = vmatpush2.msra.mxu0 0.0
        %1972 = vmatprep.subr.mxu0 0.0
        %1973 = vmatpush2.msra.mxu0 0.0
        %1974 = vmatprep.subr.mxu0 0.0
        %1975 = vmatpush2.msra.mxu0 0.0
        %1976 = vmatprep.subr.mxu0 0.0
        %1977 = vmatpush2.msra.mxu0 0.0
        %1978 = vmatprep.subr.mxu0 0.0
        %1979 = vmatpush2.msra.mxu0 0.0
        %1980 = vmatprep.subr.mxu0 0.0
        %1981 = vmatpush2.msra.mxu0 0.0
        %1982 = vmatprep.subr.mxu0 0.0
        %1983 = vmatpush2.msra.mxu0 0.0
        %1984 = vmatprep.subr.mxu0 0.0
        %1985 = vmatpush2.msra.mxu0 0.0
        %1986 = vmatprep.subr.mxu0 0.0
        %1987 = vmatpush2.msra.mxu0 0.0
        %1988 = vmatprep.subr.mxu0 0.0
        %1989 = vmatpush2.msra.mxu0 0.0
        %1990 = vmatprep.subr.mxu0 0.0
        %1991 = vmatpush2.msra.mxu0 0.0
        %1992 = vmatprep.subr.mxu0 0.0
        %1993 = vmatpush2.msra.mxu0 0.0
        %1994 = vmatprep.subr.mxu0 0.0
        %1995 = vmatpush2.msra.mxu0 0.0
        %1996 = vmatprep.subr.mxu0 0.0
        %1997 = vmatpush2.msra.mxu0 0.0
        %1998 = vmatprep.mubr.f32.mxu0 0.0
        %1999 = vmatmul.mubr.f32.gmra.mxu0 %v1926
        %v2000 = vpop.f32.mrf.mxu0
        %v2001 = vadd.f32 0.0, %v2000
        %v2002 = vpop.f32.mrf.mxu0
        %v2003 = vadd.f32 0.0, %v2002
        %2004 = vdwg.mxu0
        %v2005 = vadd.f32 %v1913, %v2001
        %v2006 = vadd.f32 %v1914, %v2003
        %v2007 = vld [vmem:[%s5] sm:$0xf]
        %2009 = vset.pattern.permute.xlu0 0
        %2010 = vperm.xlu0 %2009, %v2007
        %v2011 = vpop.permute.xlu0 %2010
        %v2013 = vadd.f32 %v2005, %v2011
        %v2014 = vadd.f32 %v2006, %v2011
        %v2015 = vadd.f32 %v2013, %v250
        %v2016 = vadd.f32 %v2014, %v252
        %v2017 = vmax.f32 %v2015, 0.0
        %v2018 = vmax.f32 %v2016, 0.0
        %v2021 = vcombine.low %v2017, %v2018
        %2023 = vst [vmem:[%s244] sm:$0xff] %v2021
        %s2024 = sand.u32 %s159, 1
        %s2025 = scalar_lea.sflag [#allocation3], %s2024
        %s2026 = sand.u32 %s159, 1
        %s2027 = smul.addr %s2026, 8
        %s2028 = scalar_lea.vmem [#allocation2], %s2027
        // Predicated region
        $region45: #{tpu_custom_call.1} parent=43 // pred_check
          %p2029 = pneg %p169
        $region46: #{tpu_custom_call.1} parent=43 // pred_check_branch
          %2031 = sbr.rel (%p2029) target = $region48
        $region47: #{tpu_custom_call.1} parent=43 // pred_region
          %s2033 = ssub.s32 128, 128
          %2034 = vsyncadd %s2025, %s2033
          %s2035 = smul.addr %s20, 2
          %s2036 = smul.addr %s2035, 64
          %s2037 = scalar_lea.hbm %s6, %s2036
          %s2039 = sshll.u32 %s2028, 4
          %s2040 = int_to_ptr.vmem [resolvable:$true] %s2039
          %2042 = dma.vmem_to_hbm [thread:$0]  %s2040, 128, %s2037, %s2025
        $region48: #{tpu_custom_call.1} parent=43 // pred_fallthru
          _
      $region44: #{tpu_custom_call.1} parent=5 // pred_fallthru
        _
      %p2043 = scmp.le.s32.totalorder 2, %s15
      // Predicated region
      $region49: #{tpu_custom_call.1} parent=5 // pred_check
        %p2044 = pneg %p2043
      $region50: #{tpu_custom_call.1} parent=5 // pred_check_branch
        %2046 = sbr.rel (%p2044) target = $region52
      $region51: #{tpu_custom_call.1} parent=5 // pred_region
        %s2047 = ssub.s32 %s15, 2
        // Predicated region
        $region53: #{tpu_custom_call.1} parent=51 // pred_check
          %p2048 = pneg %p175
        $region54: #{tpu_custom_call.1} parent=51 // pred_check_branch
          %2050 = sbr.rel (%p2048) target = $region56
        $region55: #{tpu_custom_call.1} parent=51 // pred_region
          %s2051 = sand.u32 %s160, 1
          %s2052 = scalar_lea.sflag [#allocation3], %s2051
          %s2053 = sand.u32 %s160, 1
          %s2054 = smul.addr %s2053, 8
          %s2055 = scalar_lea.vmem [#allocation2], %s2054
          %2056 = dma.done %s2052, 128
        $region56: #{tpu_custom_call.1} parent=51 // pred_fallthru
          _
      $region52: #{tpu_custom_call.1} parent=5 // pred_fallthru
        _
    $region6: #{tpu_custom_call.1} parent=1 // loop_footer
      %s19 = sadd.s32 1, %s15
    $region7: #{tpu_custom_call.1} parent=1 // loop_footer_branch
      %14 = sbr.rel target = $region3
    $region8: #{tpu_custom_call.1} parent=1 // loop_exit
      _
    %2057 = vsyncpa [#allocation3], 1
    %s2058 = scalar_lea.sflag [#allocation3], 1
    %2059 = vsyncpa %s2058, 1

</llo_original>
